<compile_context>
chip_gen: v5e
topology: v5e:2x2
jax: 0.10.0
libtpu: 0.0.40
codegen_flags: <defaults>
</compile_context>

<pallas_src>
import functools
import math

import jax
import jax.numpy as jnp
from jax.experimental import pallas as pl
from jax.experimental.pallas import tpu as pltpu

_LANE = 128


# ------------------------------ in-kernel math ------------------------------

def _layernorm(x, gamma, beta, eps):
    mean = jnp.mean(x, axis=-1, keepdims=True)
    c = x - mean
    var = jnp.mean(c * c, axis=-1, keepdims=True)
    return (c * jax.lax.rsqrt(var + eps)) * gamma + beta


def _erf(z):
    # Abramowitz & Stegun 7.1.26 rational approximation, |err| < 1.5e-7.
    a1, a2, a3, a4, a5 = (0.254829592, -0.284496736, 1.421413741,
                          -1.453152027, 1.061405429)
    p = 0.3275911
    az = jnp.abs(z)
    t = 1.0 / (1.0 + p * az)
    poly = ((((a5 * t + a4) * t + a3) * t + a2) * t + a1) * t
    y = 1.0 - poly * jnp.exp(-az * az)
    return jnp.where(z < 0.0, -y, y)


def _gelu_exact(x):
    # torch.nn.GELU() default (erf-based).
    return 0.5 * x * (1.0 + _erf(x * (1.0 / math.sqrt(2.0))))


def _mm(a, b, dtype):
    """a @ b with (in, out) weights; optional bf16 operands, f32 accumulation."""
    return jax.lax.dot_general(
        a.astype(dtype), b.astype(dtype),
        dimension_numbers=(((1,), (0,)), ((), ())),
        preferred_element_type=jnp.float32)


# ------------------------------- fused kernel -------------------------------

def _encoder_layer_kernel(x_ref,
                          ln1_g_ref, ln1_b_ref,
                          wqkv_ref, bqkv_ref,
                          wo_ref, bo_ref,
                          ln2_g_ref, ln2_b_ref,
                          w1_ref, b1_ref,
                          w2_ref, b2_ref,
                          wout_ref, bout_ref,
                          o_ref,
                          *, batch, seq, num_heads, head_dim, eps,
                          inv_sqrt_hd, matmul_dtype):
    x = x_ref[...]                                      # (B*S, D) float32
    d = num_heads * head_dim

    # ---- LayerNorm1 fused into the QKV projection --------------------------
    hidden = _layernorm(x, ln1_g_ref[...], ln1_b_ref[...], eps)
    qkv = _mm(hidden, wqkv_ref[...], matmul_dtype) + bqkv_ref[...]   # (B*S, 3D)
    # Sublane-aligned split of the row axis back into (B, S) for attention.
    qkv3 = qkv.reshape(batch, seq, 3 * d)               # (B, S, 3D)

    # ---- multi-head attention: per-head, batched over B --------------------
    ctx_heads = []
    for h in range(num_heads):                          # short static unroll
        lo, hi = h * head_dim, (h + 1) * head_dim
        q = qkv3[:, :, lo:hi].astype(matmul_dtype)            # (B, S, hd)
        k = qkv3[:, :, d + lo:d + hi].astype(matmul_dtype)
        v = qkv3[:, :, 2 * d + lo:2 * d + hi].astype(matmul_dtype)
        s = jnp.einsum('bqd,bkd->bqk', q, k,
                       preferred_element_type=jnp.float32) * inv_sqrt_hd
        # Reference: F.softmax(scores, dim=1) on a (B, Sq, Sk) tensor, i.e.
        # softmax over the QUERY axis -> each key-column sums to one.
        m = jnp.max(s, axis=1, keepdims=True)
        e = jnp.exp(s - m)
        w = e * pl.reciprocal(jnp.sum(e, axis=1, keepdims=True), approx=True)
        ctx_heads.append(
            jnp.einsum('bqk,bkd->bqd', w.astype(matmul_dtype), v,
                       preferred_element_type=jnp.float32))       # (B, S, hd)

    # Concatenate heads along lanes, then ONE well-shaped out-projection.
    ctx = jnp.concatenate(ctx_heads, axis=-1).reshape(batch * seq, d)
    acc = x + _mm(ctx, wo_ref[...], matmul_dtype) + bo_ref[...]   # residual

    # ---- LayerNorm2 + FeedForward (GELU + residual fused into epilogues) ---
    h2 = _layernorm(acc, ln2_g_ref[...], ln2_b_ref[...], eps)
    f = _mm(h2, w1_ref[...], matmul_dtype) + b1_ref[...]
    f = _gelu_exact(f)
    f = _mm(f, w2_ref[...], matmul_dtype) + b2_ref[...]
    y = acc + f                                         # FF dropout = identity (eval)

    # ---- final output projection (lane-padded to a multiple of 128) --------
    out = _mm(y, wout_ref[...], matmul_dtype) + bout_ref[...]
    o_ref[...] = out.astype(o_ref.dtype)


# --------------------------------- wrapper ----------------------------------

def transformer_encoder_layer(x, params, *, num_heads, out_size, eps=1e-5,
                              matmul_dtype=jnp.bfloat16):
    """Fused TransformerEncoderLayer forward. x: (B, S, D) float32."""
    B, S, D = x.shape
    assert D % num_heads == 0
    hd = D // num_heads
    inter = params["w1"].shape[1]
    out_pad = params["wout"].shape[1]                   # multiple of 128
    rows = B * S

    x2d = x.reshape(rows, D)                            # merge batch x seq rows

    kern = functools.partial(
        _encoder_layer_kernel,
        batch=B, seq=S, num_heads=num_heads, head_dim=hd, eps=eps,
        inv_sqrt_hd=1.0 / math.sqrt(hd), matmul_dtype=matmul_dtype)

    def full2(shape):
        # Whole-array block, constant block index -> fetched once, VMEM-resident.
        return pl.BlockSpec(shape, lambda i: (0, 0))

    y = pl.pallas_call(
        kern,
        out_shape=jax.ShapeDtypeStruct((rows, out_pad), jnp.float32),
        grid=(1,),                                      # single fused step
        in_specs=[
            full2((rows, D)),
            full2((1, D)), full2((1, D)),
            full2((D, 3 * D)), full2((1, 3 * D)),
            full2((D, D)), full2((1, D)),
            full2((1, D)), full2((1, D)),
            full2((D, inter)), full2((1, inter)),
            full2((inter, D)), full2((1, D)),
            full2((D, out_pad)), full2((1, out_pad)),
        ],
        out_specs=full2((rows, out_pad)),
        compiler_params=pltpu.CompilerParams(
            dimension_semantics=("arbitrary",),
            vmem_limit_bytes=32 * 1024 * 1024),
    )(x2d,
      params["ln1_g"], params["ln1_b"],
      params["wqkv"], params["bqkv"],
      params["wo"], params["bo"],
      params["ln2_g"], params["ln2_b"],
      params["w1"], params["b1"],
      params["w2"], params["b2"],
      params["wout"], params["bout"])

    return y.reshape(B, S, out_pad)[:, :, :out_size]    # strip lane padding


# ------------------------------ parameter setup ------------------------------

def init_params(key, hidden, inter, out_size, num_heads):
    """Weights stored pre-transposed to (in, out)  (== torch Linear weight.T).
    Per-head Wq/Wk/Wv are concatenated head-major along the output axis and the
    q|k|v blocks are fused into a single (D, 3D) projection."""
    del num_heads  # head structure is purely a column-block interpretation

    def lin(k, din, dout, scale=0.05):
        kw, kb = jax.random.split(k)
        w = scale * jax.random.normal(kw, (din, dout), jnp.float32)
        b = scale * jax.random.normal(kb, (dout,), jnp.float32)
        return w, b

    ks = jax.random.split(key, 7)
    wq, bq = lin(ks[0], hidden, hidden)      # columns ordered [head0 | head1 | ...]
    wk, bk = lin(ks[1], hidden, hidden)
    wv, bv = lin(ks[2], hidden, hidden)
    wo, bo = lin(ks[3], hidden, hidden)
    w1, b1 = lin(ks[4], hidden, inter)
    w2, b2 = lin(ks[5], inter, hidden)
    wout, bout = lin(ks[6], hidden, out_size)

    out_pad = ((out_size + _LANE - 1) // _LANE) * _LANE
    wout = jnp.pad(wout, ((0, 0), (0, out_pad - out_size)))
    bout = jnp.pad(bout, (0, out_pad - out_size))

    return {
        "ln1_g": jnp.ones((1, hidden), jnp.float32),
        "ln1_b": jnp.zeros((1, hidden), jnp.float32),
        "ln2_g": jnp.ones((1, hidden), jnp.float32),
        "ln2_b": jnp.zeros((1, hidden), jnp.float32),
        "wqkv": jnp.concatenate([wq, wk, wv], axis=1),          # (D, 3D)
        "bqkv": jnp.concatenate([bq, bk, bv]).reshape(1, 3 * hidden),
        "wo": wo, "bo": bo.reshape(1, hidden),
        "w1": w1, "b1": b1.reshape(1, inter),
        "w2": w2, "b2": b2.reshape(1, hidden),
        "wout": wout, "bout": bout.reshape(1, out_pad),
    }


# ---------------------------- pure-JAX reference -----------------------------

def _reference_forward(x, params, *, num_heads, out_size, eps=1e-5):
    B, S, D = x.shape
    hd = D // num_heads

    def ln(v, g, b):
        mu = jnp.mean(v, axis=-1, keepdims=True)
        var = jnp.mean((v - mu) ** 2, axis=-1, keepdims=True)
        return (v - mu) * jax.lax.rsqrt(var + eps) * g + b

    hidden = ln(x, params["ln1_g"][0], params["ln1_b"][0])
    qkv = hidden @ params["wqkv"] + params["bqkv"][0]
    q, k, v = qkv[..., :D], qkv[..., D:2 * D], qkv[..., 2 * D:]
    heads = []
    for h in range(num_heads):
        qh = q[..., h * hd:(h + 1) * hd]
        kh = k[..., h * hd:(h + 1) * hd]
        vh = v[..., h * hd:(h + 1) * hd]
        scores = jnp.einsum("bqd,bkd->bqk", qh, kh) / math.sqrt(hd)
        w = jax.nn.softmax(scores, axis=1)              # torch dim=1 on (B,Sq,Sk)
        heads.append(jnp.einsum("bqk,bkd->bqd", w, vh))
    attn = jnp.concatenate(heads, axis=-1) @ params["wo"] + params["bo"][0]
    x1 = x + attn
    h2 = ln(x1, params["ln2_g"][0], params["ln2_b"][0])
    f = h2 @ params["w1"] + params["b1"][0]
    f = jax.nn.gelu(f, approximate=False)
    f = f @ params["w2"] + params["b2"][0]
    x2 = x1 + f
    out = x2 @ params["wout"] + params["bout"][0]
    return out[..., :out_size]


# ----------------------------------- main ------------------------------------

if __name__ == "__main__":
    BATCH, SEQ, HIDDEN = 2, 8, 32
    INTER, OUT, HEADS = 64, 16, 4

    key = jax.random.PRNGKey(0)
    kx, kp = jax.random.split(key)
    x = jax.random.normal(kx, (BATCH, SEQ, HIDDEN), jnp.float32)
    params = init_params(kp, HIDDEN, INTER, OUT, HEADS)

    # bf16 MXU operands (default) and exact-f32 operands, both f32 accumulation.
    fwd_bf16 = jax.jit(functools.partial(
        transformer_encoder_layer, num_heads=HEADS, out_size=OUT))
    fwd_f32 = jax.jit(functools.partial(
        transformer_encoder_layer, num_heads=HEADS, out_size=OUT,
        matmul_dtype=jnp.float32))

    y_bf16 = fwd_bf16(x, params)
    y_f32 = fwd_f32(x, params)
    jax.block_until_ready((y_bf16, y_f32))

    assert y_bf16.shape == (BATCH, SEQ, OUT), y_bf16.shape
    assert bool(jnp.all(jnp.isfinite(y_bf16)))
    assert bool(jnp.all(jnp.isfinite(y_f32)))

    y_ref = _reference_forward(x, params, num_heads=HEADS, out_size=OUT)
    err_f32 = float(jnp.max(jnp.abs(y_f32 - y_ref)))
    err_bf16 = float(jnp.max(jnp.abs(y_bf16 - y_ref)))
    assert bool(jnp.allclose(y_f32, y_ref, rtol=1e-2, atol=1e-2)), err_f32
    # bf16 operand rounding (f32 accumulation) -> slightly looser tolerance.
    assert bool(jnp.allclose(y_bf16, y_ref, rtol=5e-2, atol=5e-2)), err_bf16

    print("KERNEL_OK")
</pallas_src>

<mosaic_0001>
module attributes {stable_mosaic.version = 11 : i64} {
  func.func @_encoder_layer_kernel(%arg0: i32, %arg1: memref<16x32xf32, #tpu.memory_space<vmem>>, %arg2: memref<1x32xf32, #tpu.memory_space<vmem>>, %arg3: memref<1x32xf32, #tpu.memory_space<vmem>>, %arg4: memref<32x96xf32, #tpu.memory_space<vmem>>, %arg5: memref<1x96xf32, #tpu.memory_space<vmem>>, %arg6: memref<32x32xf32, #tpu.memory_space<vmem>>, %arg7: memref<1x32xf32, #tpu.memory_space<vmem>>, %arg8: memref<1x32xf32, #tpu.memory_space<vmem>>, %arg9: memref<1x32xf32, #tpu.memory_space<vmem>>, %arg10: memref<32x64xf32, #tpu.memory_space<vmem>>, %arg11: memref<1x64xf32, #tpu.memory_space<vmem>>, %arg12: memref<64x32xf32, #tpu.memory_space<vmem>>, %arg13: memref<1x32xf32, #tpu.memory_space<vmem>>, %arg14: memref<32x128xf32, #tpu.memory_space<vmem>>, %arg15: memref<1x128xf32, #tpu.memory_space<vmem>>, %arg16: memref<16x128xf32, #tpu.memory_space<vmem>>) attributes {dimension_semantics = [#tpu.dimension_semantics<arbitrary>], iteration_bounds = array<i64: 1>, scalar_prefetch = 0 : i64, scratch_operands = 0 : i64, tpu.core_type = #tpu.core_type<tc>, window_params = [{pipeline_mode = #tpu.pipeline_mode<synchronous>, transform_indices = @transform_0, window_bounds = array<i64: 16, 32>}, {pipeline_mode = #tpu.pipeline_mode<synchronous>, transform_indices = @transform_1, window_bounds = array<i64: 1, 32>}, {pipeline_mode = #tpu.pipeline_mode<synchronous>, transform_indices = @transform_2, window_bounds = array<i64: 1, 32>}, {pipeline_mode = #tpu.pipeline_mode<synchronous>, transform_indices = @transform_3, window_bounds = array<i64: 32, 96>}, {pipeline_mode = #tpu.pipeline_mode<synchronous>, transform_indices = @transform_4, window_bounds = array<i64: 1, 96>}, {pipeline_mode = #tpu.pipeline_mode<synchronous>, transform_indices = @transform_5, window_bounds = array<i64: 32, 32>}, {pipeline_mode = #tpu.pipeline_mode<synchronous>, transform_indices = @transform_6, window_bounds = array<i64: 1, 32>}, {pipeline_mode = #tpu.pipeline_mode<synchronous>, transform_indices = @transform_7, window_bounds = array<i64: 1, 32>}, {pipeline_mode = #tpu.pipeline_mode<synchronous>, transform_indices = @transform_8, window_bounds = array<i64: 1, 32>}, {pipeline_mode = #tpu.pipeline_mode<synchronous>, transform_indices = @transform_9, window_bounds = array<i64: 32, 64>}, {pipeline_mode = #tpu.pipeline_mode<synchronous>, transform_indices = @transform_10, window_bounds = array<i64: 1, 64>}, {pipeline_mode = #tpu.pipeline_mode<synchronous>, transform_indices = @transform_11, window_bounds = array<i64: 64, 32>}, {pipeline_mode = #tpu.pipeline_mode<synchronous>, transform_indices = @transform_12, window_bounds = array<i64: 1, 32>}, {pipeline_mode = #tpu.pipeline_mode<synchronous>, transform_indices = @transform_13, window_bounds = array<i64: 32, 128>}, {pipeline_mode = #tpu.pipeline_mode<synchronous>, transform_indices = @transform_14, window_bounds = array<i64: 1, 128>}, {pipeline_mode = #tpu.pipeline_mode<synchronous>, transform_indices = @transform_15, window_bounds = array<i64: 16, 128>}]} {
    %c0 = arith.constant 0 : index
    %c0_0 = arith.constant 0 : index
    %0 = vector.load %arg1[%c0, %c0_0] : memref<16x32xf32, #tpu.memory_space<vmem>>, vector<16x32xf32>
    %c0_1 = arith.constant 0 : index
    %c0_2 = arith.constant 0 : index
    %1 = vector.load %arg2[%c0_1, %c0_2] : memref<1x32xf32, #tpu.memory_space<vmem>>, vector<1x32xf32>
    %c0_3 = arith.constant 0 : index
    %c0_4 = arith.constant 0 : index
    %2 = vector.load %arg3[%c0_3, %c0_4] : memref<1x32xf32, #tpu.memory_space<vmem>>, vector<1x32xf32>
    %cst = arith.constant dense<0.000000e+00> : vector<16xf32>
    %3 = vector.multi_reduction <add>, %0, %cst [1] : vector<16x32xf32> to vector<16xf32>
    %4 = vector.shape_cast %3 : vector<16xf32> to vector<16x1xf32>
    %cst_5 = arith.constant 3.200000e+01 : f32
    %5 = vector.broadcast %cst_5 : f32 to vector<16x1xf32>
    %6 = arith.divf %4, %5 : vector<16x1xf32>
    %7 = vector.broadcast %6 : vector<16x1xf32> to vector<16x32xf32>
    %8 = arith.subf %0, %7 : vector<16x32xf32>
    %9 = arith.mulf %8, %8 : vector<16x32xf32>
    %cst_6 = arith.constant dense<0.000000e+00> : vector<16xf32>
    %10 = vector.multi_reduction <add>, %9, %cst_6 [1] : vector<16x32xf32> to vector<16xf32>
    %11 = vector.shape_cast %10 : vector<16xf32> to vector<16x1xf32>
    %cst_7 = arith.constant 3.200000e+01 : f32
    %12 = vector.broadcast %cst_7 : f32 to vector<16x1xf32>
    %13 = arith.divf %11, %12 : vector<16x1xf32>
    %cst_8 = arith.constant 9.99999974E-6 : f32
    %14 = vector.broadcast %cst_8 : f32 to vector<16x1xf32>
    %15 = arith.addf %13, %14 : vector<16x1xf32>
    %16 = math.rsqrt %15 : vector<16x1xf32>
    %17 = vector.broadcast %16 : vector<16x1xf32> to vector<16x32xf32>
    %18 = arith.mulf %8, %17 : vector<16x32xf32>
    %19 = vector.broadcast %1 : vector<1x32xf32> to vector<16x32xf32>
    %20 = arith.mulf %18, %19 : vector<16x32xf32>
    %21 = vector.broadcast %2 : vector<1x32xf32> to vector<16x32xf32>
    %22 = arith.addf %20, %21 : vector<16x32xf32>
    %c0_9 = arith.constant 0 : index
    %c0_10 = arith.constant 0 : index
    %23 = vector.load %arg4[%c0_9, %c0_10] : memref<32x96xf32, #tpu.memory_space<vmem>>, vector<32x96xf32>
    %24 = arith.truncf %22 : vector<16x32xf32> to vector<16x32xbf16>
    %25 = arith.truncf %23 : vector<32x96xf32> to vector<32x96xbf16>
    %cst_11 = arith.constant dense<0.000000e+00> : vector<16x96xf32>
    %26 = tpu.matmul %24, %25, %cst_11 {dimension_numbers = #tpu.dot_dimension_numbers<[1], [0], [0], [1], [0, 0, 1, 1], [], []>} : vector<16x32xbf16>, vector<32x96xbf16>, vector<16x96xf32> -> vector<16x96xf32>
    %c0_12 = arith.constant 0 : index
    %c0_13 = arith.constant 0 : index
    %27 = vector.load %arg5[%c0_12, %c0_13] : memref<1x96xf32, #tpu.memory_space<vmem>>, vector<1x96xf32>
    %28 = vector.broadcast %27 : vector<1x96xf32> to vector<16x96xf32>
    %29 = arith.addf %26, %28 : vector<16x96xf32>
    %30 = vector.shape_cast %29 : vector<16x96xf32> to vector<2x8x96xf32>
    %31 = vector.extract_strided_slice %30 {offsets = [0, 0, 0], sizes = [2, 8, 8], strides = [1, 1, 1]} : vector<2x8x96xf32> to vector<2x8x8xf32>
    %32 = arith.truncf %31 : vector<2x8x8xf32> to vector<2x8x8xbf16>
    %33 = vector.extract_strided_slice %30 {offsets = [0, 0, 32], sizes = [2, 8, 8], strides = [1, 1, 1]} : vector<2x8x96xf32> to vector<2x8x8xf32>
    %34 = arith.truncf %33 : vector<2x8x8xf32> to vector<2x8x8xbf16>
    %35 = vector.extract_strided_slice %30 {offsets = [0, 0, 64], sizes = [2, 8, 8], strides = [1, 1, 1]} : vector<2x8x96xf32> to vector<2x8x8xf32>
    %36 = arith.truncf %35 : vector<2x8x8xf32> to vector<2x8x8xbf16>
    "tpu.trace_start"() <{level = 10 : i32, message = "bqd,bkd->bqk"}> : () -> ()
    %cst_14 = arith.constant dense<0.000000e+00> : vector<2x8x8xf32>
    %37 = tpu.matmul %32, %34, %cst_14 {dimension_numbers = #tpu.dot_dimension_numbers<[2], [2], [1], [1], [0, 0, 0, 1, 1, 1], [0], [0]>} : vector<2x8x8xbf16>, vector<2x8x8xbf16>, vector<2x8x8xf32> -> vector<2x8x8xf32>
    "tpu.trace_stop"() : () -> ()
    %cst_15 = arith.constant 0.353553385 : f32
    %38 = vector.broadcast %cst_15 : f32 to vector<2x8x8xf32>
    %39 = arith.mulf %37, %38 : vector<2x8x8xf32>
    %cst_16 = arith.constant dense<0xFF800000> : vector<2x8xf32>
    %40 = vector.multi_reduction <maximumf>, %39, %cst_16 [1] : vector<2x8x8xf32> to vector<2x8xf32>
    %41 = vector.shape_cast %40 : vector<2x8xf32> to vector<2x1x8xf32>
    %42 = vector.broadcast %41 : vector<2x1x8xf32> to vector<2x8x8xf32>
    %43 = arith.subf %39, %42 : vector<2x8x8xf32>
    %44 = math.exp %43 : vector<2x8x8xf32>
    %cst_17 = arith.constant dense<0.000000e+00> : vector<2x8xf32>
    %45 = vector.multi_reduction <add>, %44, %cst_17 [1] : vector<2x8x8xf32> to vector<2x8xf32>
    %46 = vector.shape_cast %45 : vector<2x8xf32> to vector<2x1x8xf32>
    %47 = tpu.reciprocal %46 {approx = true} : vector<2x1x8xf32> -> vector<2x1x8xf32>
    %48 = vector.broadcast %47 : vector<2x1x8xf32> to vector<2x8x8xf32>
    %49 = arith.mulf %44, %48 : vector<2x8x8xf32>
    %50 = arith.truncf %49 : vector<2x8x8xf32> to vector<2x8x8xbf16>
    "tpu.trace_start"() <{level = 10 : i32, message = "bqk,bkd->bqd"}> : () -> ()
    %cst_18 = arith.constant dense<0.000000e+00> : vector<2x8x8xf32>
    %51 = tpu.matmul %50, %36, %cst_18 {dimension_numbers = #tpu.dot_dimension_numbers<[2], [1], [1], [2], [0, 0, 0, 1, 1, 2], [0], [0]>} : vector<2x8x8xbf16>, vector<2x8x8xbf16>, vector<2x8x8xf32> -> vector<2x8x8xf32>
    "tpu.trace_stop"() : () -> ()
    %52 = vector.extract_strided_slice %30 {offsets = [0, 0, 8], sizes = [2, 8, 8], strides = [1, 1, 1]} : vector<2x8x96xf32> to vector<2x8x8xf32>
    %53 = arith.truncf %52 : vector<2x8x8xf32> to vector<2x8x8xbf16>
    %54 = vector.extract_strided_slice %30 {offsets = [0, 0, 40], sizes = [2, 8, 8], strides = [1, 1, 1]} : vector<2x8x96xf32> to vector<2x8x8xf32>
    %55 = arith.truncf %54 : vector<2x8x8xf32> to vector<2x8x8xbf16>
    %56 = vector.extract_strided_slice %30 {offsets = [0, 0, 72], sizes = [2, 8, 8], strides = [1, 1, 1]} : vector<2x8x96xf32> to vector<2x8x8xf32>
    %57 = arith.truncf %56 : vector<2x8x8xf32> to vector<2x8x8xbf16>
    "tpu.trace_start"() <{level = 10 : i32, message = "bqd,bkd->bqk"}> : () -> ()
    %cst_19 = arith.constant dense<0.000000e+00> : vector<2x8x8xf32>
    %58 = tpu.matmul %53, %55, %cst_19 {dimension_numbers = #tpu.dot_dimension_numbers<[2], [2], [1], [1], [0, 0, 0, 1, 1, 1], [0], [0]>} : vector<2x8x8xbf16>, vector<2x8x8xbf16>, vector<2x8x8xf32> -> vector<2x8x8xf32>
    "tpu.trace_stop"() : () -> ()
    %cst_20 = arith.constant 0.353553385 : f32
    %59 = vector.broadcast %cst_20 : f32 to vector<2x8x8xf32>
    %60 = arith.mulf %58, %59 : vector<2x8x8xf32>
    %cst_21 = arith.constant dense<0xFF800000> : vector<2x8xf32>
    %61 = vector.multi_reduction <maximumf>, %60, %cst_21 [1] : vector<2x8x8xf32> to vector<2x8xf32>
    %62 = vector.shape_cast %61 : vector<2x8xf32> to vector<2x1x8xf32>
    %63 = vector.broadcast %62 : vector<2x1x8xf32> to vector<2x8x8xf32>
    %64 = arith.subf %60, %63 : vector<2x8x8xf32>
    %65 = math.exp %64 : vector<2x8x8xf32>
    %cst_22 = arith.constant dense<0.000000e+00> : vector<2x8xf32>
    %66 = vector.multi_reduction <add>, %65, %cst_22 [1] : vector<2x8x8xf32> to vector<2x8xf32>
    %67 = vector.shape_cast %66 : vector<2x8xf32> to vector<2x1x8xf32>
    %68 = tpu.reciprocal %67 {approx = true} : vector<2x1x8xf32> -> vector<2x1x8xf32>
    %69 = vector.broadcast %68 : vector<2x1x8xf32> to vector<2x8x8xf32>
    %70 = arith.mulf %65, %69 : vector<2x8x8xf32>
    %71 = arith.truncf %70 : vector<2x8x8xf32> to vector<2x8x8xbf16>
    "tpu.trace_start"() <{level = 10 : i32, message = "bqk,bkd->bqd"}> : () -> ()
    %cst_23 = arith.constant dense<0.000000e+00> : vector<2x8x8xf32>
    %72 = tpu.matmul %71, %57, %cst_23 {dimension_numbers = #tpu.dot_dimension_numbers<[2], [1], [1], [2], [0, 0, 0, 1, 1, 2], [0], [0]>} : vector<2x8x8xbf16>, vector<2x8x8xbf16>, vector<2x8x8xf32> -> vector<2x8x8xf32>
    "tpu.trace_stop"() : () -> ()
    %73 = vector.extract_strided_slice %30 {offsets = [0, 0, 16], sizes = [2, 8, 8], strides = [1, 1, 1]} : vector<2x8x96xf32> to vector<2x8x8xf32>
    %74 = arith.truncf %73 : vector<2x8x8xf32> to vector<2x8x8xbf16>
    %75 = vector.extract_strided_slice %30 {offsets = [0, 0, 48], sizes = [2, 8, 8], strides = [1, 1, 1]} : vector<2x8x96xf32> to vector<2x8x8xf32>
    %76 = arith.truncf %75 : vector<2x8x8xf32> to vector<2x8x8xbf16>
    %77 = vector.extract_strided_slice %30 {offsets = [0, 0, 80], sizes = [2, 8, 8], strides = [1, 1, 1]} : vector<2x8x96xf32> to vector<2x8x8xf32>
    %78 = arith.truncf %77 : vector<2x8x8xf32> to vector<2x8x8xbf16>
    "tpu.trace_start"() <{level = 10 : i32, message = "bqd,bkd->bqk"}> : () -> ()
    %cst_24 = arith.constant dense<0.000000e+00> : vector<2x8x8xf32>
    %79 = tpu.matmul %74, %76, %cst_24 {dimension_numbers = #tpu.dot_dimension_numbers<[2], [2], [1], [1], [0, 0, 0, 1, 1, 1], [0], [0]>} : vector<2x8x8xbf16>, vector<2x8x8xbf16>, vector<2x8x8xf32> -> vector<2x8x8xf32>
    "tpu.trace_stop"() : () -> ()
    %cst_25 = arith.constant 0.353553385 : f32
    %80 = vector.broadcast %cst_25 : f32 to vector<2x8x8xf32>
    %81 = arith.mulf %79, %80 : vector<2x8x8xf32>
    %cst_26 = arith.constant dense<0xFF800000> : vector<2x8xf32>
    %82 = vector.multi_reduction <maximumf>, %81, %cst_26 [1] : vector<2x8x8xf32> to vector<2x8xf32>
    %83 = vector.shape_cast %82 : vector<2x8xf32> to vector<2x1x8xf32>
    %84 = vector.broadcast %83 : vector<2x1x8xf32> to vector<2x8x8xf32>
    %85 = arith.subf %81, %84 : vector<2x8x8xf32>
    %86 = math.exp %85 : vector<2x8x8xf32>
    %cst_27 = arith.constant dense<0.000000e+00> : vector<2x8xf32>
    %87 = vector.multi_reduction <add>, %86, %cst_27 [1] : vector<2x8x8xf32> to vector<2x8xf32>
    %88 = vector.shape_cast %87 : vector<2x8xf32> to vector<2x1x8xf32>
    %89 = tpu.reciprocal %88 {approx = true} : vector<2x1x8xf32> -> vector<2x1x8xf32>
    %90 = vector.broadcast %89 : vector<2x1x8xf32> to vector<2x8x8xf32>
    %91 = arith.mulf %86, %90 : vector<2x8x8xf32>
    %92 = arith.truncf %91 : vector<2x8x8xf32> to vector<2x8x8xbf16>
    "tpu.trace_start"() <{level = 10 : i32, message = "bqk,bkd->bqd"}> : () -> ()
    %cst_28 = arith.constant dense<0.000000e+00> : vector<2x8x8xf32>
    %93 = tpu.matmul %92, %78, %cst_28 {dimension_numbers = #tpu.dot_dimension_numbers<[2], [1], [1], [2], [0, 0, 0, 1, 1, 2], [0], [0]>} : vector<2x8x8xbf16>, vector<2x8x8xbf16>, vector<2x8x8xf32> -> vector<2x8x8xf32>
    "tpu.trace_stop"() : () -> ()
    %94 = vector.extract_strided_slice %30 {offsets = [0, 0, 24], sizes = [2, 8, 8], strides = [1, 1, 1]} : vector<2x8x96xf32> to vector<2x8x8xf32>
    %95 = arith.truncf %94 : vector<2x8x8xf32> to vector<2x8x8xbf16>
    %96 = vector.extract_strided_slice %30 {offsets = [0, 0, 56], sizes = [2, 8, 8], strides = [1, 1, 1]} : vector<2x8x96xf32> to vector<2x8x8xf32>
    %97 = arith.truncf %96 : vector<2x8x8xf32> to vector<2x8x8xbf16>
    %98 = vector.extract_strided_slice %30 {offsets = [0, 0, 88], sizes = [2, 8, 8], strides = [1, 1, 1]} : vector<2x8x96xf32> to vector<2x8x8xf32>
    %99 = arith.truncf %98 : vector<2x8x8xf32> to vector<2x8x8xbf16>
    "tpu.trace_start"() <{level = 10 : i32, message = "bqd,bkd->bqk"}> : () -> ()
    %cst_29 = arith.constant dense<0.000000e+00> : vector<2x8x8xf32>
    %100 = tpu.matmul %95, %97, %cst_29 {dimension_numbers = #tpu.dot_dimension_numbers<[2], [2], [1], [1], [0, 0, 0, 1, 1, 1], [0], [0]>} : vector<2x8x8xbf16>, vector<2x8x8xbf16>, vector<2x8x8xf32> -> vector<2x8x8xf32>
    "tpu.trace_stop"() : () -> ()
    %cst_30 = arith.constant 0.353553385 : f32
    %101 = vector.broadcast %cst_30 : f32 to vector<2x8x8xf32>
    %102 = arith.mulf %100, %101 : vector<2x8x8xf32>
    %cst_31 = arith.constant dense<0xFF800000> : vector<2x8xf32>
    %103 = vector.multi_reduction <maximumf>, %102, %cst_31 [1] : vector<2x8x8xf32> to vector<2x8xf32>
    %104 = vector.shape_cast %103 : vector<2x8xf32> to vector<2x1x8xf32>
    %105 = vector.broadcast %104 : vector<2x1x8xf32> to vector<2x8x8xf32>
    %106 = arith.subf %102, %105 : vector<2x8x8xf32>
    %107 = math.exp %106 : vector<2x8x8xf32>
    %cst_32 = arith.constant dense<0.000000e+00> : vector<2x8xf32>
    %108 = vector.multi_reduction <add>, %107, %cst_32 [1] : vector<2x8x8xf32> to vector<2x8xf32>
    %109 = vector.shape_cast %108 : vector<2x8xf32> to vector<2x1x8xf32>
    %110 = tpu.reciprocal %109 {approx = true} : vector<2x1x8xf32> -> vector<2x1x8xf32>
    %111 = vector.broadcast %110 : vector<2x1x8xf32> to vector<2x8x8xf32>
    %112 = arith.mulf %107, %111 : vector<2x8x8xf32>
    %113 = arith.truncf %112 : vector<2x8x8xf32> to vector<2x8x8xbf16>
    "tpu.trace_start"() <{level = 10 : i32, message = "bqk,bkd->bqd"}> : () -> ()
    %cst_33 = arith.constant dense<0.000000e+00> : vector<2x8x8xf32>
    %114 = tpu.matmul %113, %99, %cst_33 {dimension_numbers = #tpu.dot_dimension_numbers<[2], [1], [1], [2], [0, 0, 0, 1, 1, 2], [0], [0]>} : vector<2x8x8xbf16>, vector<2x8x8xbf16>, vector<2x8x8xf32> -> vector<2x8x8xf32>
    "tpu.trace_stop"() : () -> ()
    %115 = tpu.concatenate %51, %72, %93, %114 in 2 : vector<2x8x8xf32>, vector<2x8x8xf32>, vector<2x8x8xf32>, vector<2x8x8xf32> -> vector<2x8x32xf32>
    %116 = vector.shape_cast %115 : vector<2x8x32xf32> to vector<16x32xf32>
    %c0_34 = arith.constant 0 : index
    %c0_35 = arith.constant 0 : index
    %117 = vector.load %arg6[%c0_34, %c0_35] : memref<32x32xf32, #tpu.memory_space<vmem>>, vector<32x32xf32>
    %118 = arith.truncf %116 : vector<16x32xf32> to vector<16x32xbf16>
    %119 = arith.truncf %117 : vector<32x32xf32> to vector<32x32xbf16>
    %cst_36 = arith.constant dense<0.000000e+00> : vector<16x32xf32>
    %120 = tpu.matmul %118, %119, %cst_36 {dimension_numbers = #tpu.dot_dimension_numbers<[1], [0], [0], [1], [0, 0, 1, 1], [], []>} : vector<16x32xbf16>, vector<32x32xbf16>, vector<16x32xf32> -> vector<16x32xf32>
    %121 = arith.addf %0, %120 : vector<16x32xf32>
    %c0_37 = arith.constant 0 : index
    %c0_38 = arith.constant 0 : index
    %122 = vector.load %arg7[%c0_37, %c0_38] : memref<1x32xf32, #tpu.memory_space<vmem>>, vector<1x32xf32>
    %123 = vector.broadcast %122 : vector<1x32xf32> to vector<16x32xf32>
    %124 = arith.addf %121, %123 : vector<16x32xf32>
    %c0_39 = arith.constant 0 : index
    %c0_40 = arith.constant 0 : index
    %125 = vector.load %arg8[%c0_39, %c0_40] : memref<1x32xf32, #tpu.memory_space<vmem>>, vector<1x32xf32>
    %c0_41 = arith.constant 0 : index
    %c0_42 = arith.constant 0 : index
    %126 = vector.load %arg9[%c0_41, %c0_42] : memref<1x32xf32, #tpu.memory_space<vmem>>, vector<1x32xf32>
    %cst_43 = arith.constant dense<0.000000e+00> : vector<16xf32>
    %127 = vector.multi_reduction <add>, %124, %cst_43 [1] : vector<16x32xf32> to vector<16xf32>
    %128 = vector.shape_cast %127 : vector<16xf32> to vector<16x1xf32>
    %cst_44 = arith.constant 3.200000e+01 : f32
    %129 = vector.broadcast %cst_44 : f32 to vector<16x1xf32>
    %130 = arith.divf %128, %129 : vector<16x1xf32>
    %131 = vector.broadcast %130 : vector<16x1xf32> to vector<16x32xf32>
    %132 = arith.subf %124, %131 : vector<16x32xf32>
    %133 = arith.mulf %132, %132 : vector<16x32xf32>
    %cst_45 = arith.constant dense<0.000000e+00> : vector<16xf32>
    %134 = vector.multi_reduction <add>, %133, %cst_45 [1] : vector<16x32xf32> to vector<16xf32>
    %135 = vector.shape_cast %134 : vector<16xf32> to vector<16x1xf32>
    %cst_46 = arith.constant 3.200000e+01 : f32
    %136 = vector.broadcast %cst_46 : f32 to vector<16x1xf32>
    %137 = arith.divf %135, %136 : vector<16x1xf32>
    %cst_47 = arith.constant 9.99999974E-6 : f32
    %138 = vector.broadcast %cst_47 : f32 to vector<16x1xf32>
    %139 = arith.addf %137, %138 : vector<16x1xf32>
    %140 = math.rsqrt %139 : vector<16x1xf32>
    %141 = vector.broadcast %140 : vector<16x1xf32> to vector<16x32xf32>
    %142 = arith.mulf %132, %141 : vector<16x32xf32>
    %143 = vector.broadcast %125 : vector<1x32xf32> to vector<16x32xf32>
    %144 = arith.mulf %142, %143 : vector<16x32xf32>
    %145 = vector.broadcast %126 : vector<1x32xf32> to vector<16x32xf32>
    %146 = arith.addf %144, %145 : vector<16x32xf32>
    %c0_48 = arith.constant 0 : index
    %c0_49 = arith.constant 0 : index
    %147 = vector.load %arg10[%c0_48, %c0_49] : memref<32x64xf32, #tpu.memory_space<vmem>>, vector<32x64xf32>
    %148 = arith.truncf %146 : vector<16x32xf32> to vector<16x32xbf16>
    %149 = arith.truncf %147 : vector<32x64xf32> to vector<32x64xbf16>
    %cst_50 = arith.constant dense<0.000000e+00> : vector<16x64xf32>
    %150 = tpu.matmul %148, %149, %cst_50 {dimension_numbers = #tpu.dot_dimension_numbers<[1], [0], [0], [1], [0, 0, 1, 1], [], []>} : vector<16x32xbf16>, vector<32x64xbf16>, vector<16x64xf32> -> vector<16x64xf32>
    %c0_51 = arith.constant 0 : index
    %c0_52 = arith.constant 0 : index
    %151 = vector.load %arg11[%c0_51, %c0_52] : memref<1x64xf32, #tpu.memory_space<vmem>>, vector<1x64xf32>
    %152 = vector.broadcast %151 : vector<1x64xf32> to vector<16x64xf32>
    %153 = arith.addf %150, %152 : vector<16x64xf32>
    %cst_53 = arith.constant 5.000000e-01 : f32
    %154 = vector.broadcast %cst_53 : f32 to vector<16x64xf32>
    %155 = arith.mulf %154, %153 : vector<16x64xf32>
    %cst_54 = arith.constant 0.707106769 : f32
    %156 = vector.broadcast %cst_54 : f32 to vector<16x64xf32>
    %157 = arith.mulf %153, %156 : vector<16x64xf32>
    %158 = math.absf %157 : vector<16x64xf32>
    %cst_55 = arith.constant 0.327591091 : f32
    %159 = vector.broadcast %cst_55 : f32 to vector<16x64xf32>
    %160 = arith.mulf %159, %158 : vector<16x64xf32>
    %cst_56 = arith.constant 1.000000e+00 : f32
    %161 = vector.broadcast %cst_56 : f32 to vector<16x64xf32>
    %162 = arith.addf %161, %160 : vector<16x64xf32>
    %cst_57 = arith.constant 1.000000e+00 : f32
    %163 = vector.broadcast %cst_57 : f32 to vector<16x64xf32>
    %164 = arith.divf %163, %162 : vector<16x64xf32>
    %cst_58 = arith.constant 1.06140542 : f32
    %165 = vector.broadcast %cst_58 : f32 to vector<16x64xf32>
    %166 = arith.mulf %165, %164 : vector<16x64xf32>
    %cst_59 = arith.constant -1.45315206 : f32
    %167 = vector.broadcast %cst_59 : f32 to vector<16x64xf32>
    %168 = arith.addf %166, %167 : vector<16x64xf32>
    %169 = arith.mulf %168, %164 : vector<16x64xf32>
    %cst_60 = arith.constant 1.42141378 : f32
    %170 = vector.broadcast %cst_60 : f32 to vector<16x64xf32>
    %171 = arith.addf %169, %170 : vector<16x64xf32>
    %172 = arith.mulf %171, %164 : vector<16x64xf32>
    %cst_61 = arith.constant -0.284496725 : f32
    %173 = vector.broadcast %cst_61 : f32 to vector<16x64xf32>
    %174 = arith.addf %172, %173 : vector<16x64xf32>
    %175 = arith.mulf %174, %164 : vector<16x64xf32>
    %cst_62 = arith.constant 0.254829586 : f32
    %176 = vector.broadcast %cst_62 : f32 to vector<16x64xf32>
    %177 = arith.addf %175, %176 : vector<16x64xf32>
    %178 = arith.mulf %177, %164 : vector<16x64xf32>
    %cst_63 = arith.constant 0.000000e+00 : f32
    %179 = vector.broadcast %cst_63 : f32 to vector<16x64xf32>
    %180 = arith.subf %179, %158 : vector<16x64xf32>
    %181 = arith.mulf %180, %158 : vector<16x64xf32>
    %182 = math.exp %181 : vector<16x64xf32>
    %183 = arith.mulf %178, %182 : vector<16x64xf32>
    %cst_64 = arith.constant 1.000000e+00 : f32
    %184 = vector.broadcast %cst_64 : f32 to vector<16x64xf32>
    %185 = arith.subf %184, %183 : vector<16x64xf32>
    %cst_65 = arith.constant 0.000000e+00 : f32
    %186 = vector.broadcast %cst_65 : f32 to vector<16x64xf32>
    %187 = arith.cmpf olt, %157, %186 : vector<16x64xf32>
    %cst_66 = arith.constant 0.000000e+00 : f32
    %188 = vector.broadcast %cst_66 : f32 to vector<16x64xf32>
    %189 = arith.subf %188, %185 : vector<16x64xf32>
    %190 = arith.select %187, %189, %185 : vector<16x64xi1>, vector<16x64xf32>
    %cst_67 = arith.constant 1.000000e+00 : f32
    %191 = vector.broadcast %cst_67 : f32 to vector<16x64xf32>
    %192 = arith.addf %191, %190 : vector<16x64xf32>
    %193 = arith.mulf %155, %192 : vector<16x64xf32>
    %c0_68 = arith.constant 0 : index
    %c0_69 = arith.constant 0 : index
    %194 = vector.load %arg12[%c0_68, %c0_69] : memref<64x32xf32, #tpu.memory_space<vmem>>, vector<64x32xf32>
    %195 = arith.truncf %193 : vector<16x64xf32> to vector<16x64xbf16>
    %196 = arith.truncf %194 : vector<64x32xf32> to vector<64x32xbf16>
    %cst_70 = arith.constant dense<0.000000e+00> : vector<16x32xf32>
    %197 = tpu.matmul %195, %196, %cst_70 {dimension_numbers = #tpu.dot_dimension_numbers<[1], [0], [0], [1], [0, 0, 1, 1], [], []>} : vector<16x64xbf16>, vector<64x32xbf16>, vector<16x32xf32> -> vector<16x32xf32>
    %c0_71 = arith.constant 0 : index
    %c0_72 = arith.constant 0 : index
    %198 = vector.load %arg13[%c0_71, %c0_72] : memref<1x32xf32, #tpu.memory_space<vmem>>, vector<1x32xf32>
    %199 = vector.broadcast %198 : vector<1x32xf32> to vector<16x32xf32>
    %200 = arith.addf %197, %199 : vector<16x32xf32>
    %201 = arith.addf %124, %200 : vector<16x32xf32>
    %c0_73 = arith.constant 0 : index
    %c0_74 = arith.constant 0 : index
    %202 = vector.load %arg14[%c0_73, %c0_74] : memref<32x128xf32, #tpu.memory_space<vmem>>, vector<32x128xf32>
    %203 = arith.truncf %201 : vector<16x32xf32> to vector<16x32xbf16>
    %204 = arith.truncf %202 : vector<32x128xf32> to vector<32x128xbf16>
    %cst_75 = arith.constant dense<0.000000e+00> : vector<16x128xf32>
    %205 = tpu.matmul %203, %204, %cst_75 {dimension_numbers = #tpu.dot_dimension_numbers<[1], [0], [0], [1], [0, 0, 1, 1], [], []>} : vector<16x32xbf16>, vector<32x128xbf16>, vector<16x128xf32> -> vector<16x128xf32>
    %c0_76 = arith.constant 0 : index
    %c0_77 = arith.constant 0 : index
    %206 = vector.load %arg15[%c0_76, %c0_77] : memref<1x128xf32, #tpu.memory_space<vmem>>, vector<1x128xf32>
    %207 = vector.broadcast %206 : vector<1x128xf32> to vector<16x128xf32>
    %208 = arith.addf %205, %207 : vector<16x128xf32>
    %c0_78 = arith.constant 0 : index
    %c0_79 = arith.constant 0 : index
    %209 = vector.load %arg16[%c0_78, %c0_79] : memref<16x128xf32, #tpu.memory_space<vmem>>, vector<16x128xf32>
    tpu.vector_store %arg16[%c0_78, %c0_79], %208 {strides = array<i32>} : memref<16x128xf32, #tpu.memory_space<vmem>>, vector<16x128xf32>,
    return
  }
  func.func @transform_0(%arg0: i32) -> (i32, i32) {
    %c0_i32 = arith.constant 0 : i32
    %c0_i32_0 = arith.constant 0 : i32
    %c0_i32_1 = arith.constant 0 : i32
    return %c0_i32, %c0_i32_0 : i32, i32
  }
  func.func @transform_1(%arg0: i32) -> (i32, i32) {
    %c0_i32 = arith.constant 0 : i32
    %c0_i32_0 = arith.constant 0 : i32
    %c0_i32_1 = arith.constant 0 : i32
    return %c0_i32, %c0_i32_0 : i32, i32
  }
  func.func @transform_2(%arg0: i32) -> (i32, i32) {
    %c0_i32 = arith.constant 0 : i32
    %c0_i32_0 = arith.constant 0 : i32
    %c0_i32_1 = arith.constant 0 : i32
    return %c0_i32, %c0_i32_0 : i32, i32
  }
  func.func @transform_3(%arg0: i32) -> (i32, i32) {
    %c0_i32 = arith.constant 0 : i32
    %c0_i32_0 = arith.constant 0 : i32
    %c0_i32_1 = arith.constant 0 : i32
    return %c0_i32, %c0_i32_0 : i32, i32
  }
  func.func @transform_4(%arg0: i32) -> (i32, i32) {
    %c0_i32 = arith.constant 0 : i32
    %c0_i32_0 = arith.constant 0 : i32
    %c0_i32_1 = arith.constant 0 : i32
    return %c0_i32, %c0_i32_0 : i32, i32
  }
  func.func @transform_5(%arg0: i32) -> (i32, i32) {
    %c0_i32 = arith.constant 0 : i32
    %c0_i32_0 = arith.constant 0 : i32
    %c0_i32_1 = arith.constant 0 : i32
    return %c0_i32, %c0_i32_0 : i32, i32
  }
  func.func @transform_6(%arg0: i32) -> (i32, i32) {
    %c0_i32 = arith.constant 0 : i32
    %c0_i32_0 = arith.constant 0 : i32
    %c0_i32_1 = arith.constant 0 : i32
    return %c0_i32, %c0_i32_0 : i32, i32
  }
  func.func @transform_7(%arg0: i32) -> (i32, i32) {
    %c0_i32 = arith.constant 0 : i32
    %c0_i32_0 = arith.constant 0 : i32
    %c0_i32_1 = arith.constant 0 : i32
    return %c0_i32, %c0_i32_0 : i32, i32
  }
  func.func @transform_8(%arg0: i32) -> (i32, i32) {
    %c0_i32 = arith.constant 0 : i32
    %c0_i32_0 = arith.constant 0 : i32
    %c0_i32_1 = arith.constant 0 : i32
    return %c0_i32, %c0_i32_0 : i32, i32
  }
  func.func @transform_9(%arg0: i32) -> (i32, i32) {
    %c0_i32 = arith.constant 0 : i32
    %c0_i32_0 = arith.constant 0 : i32
    %c0_i32_1 = arith.constant 0 : i32
    return %c0_i32, %c0_i32_0 : i32, i32
  }
  func.func @transform_10(%arg0: i32) -> (i32, i32) {
    %c0_i32 = arith.constant 0 : i32
    %c0_i32_0 = arith.constant 0 : i32
    %c0_i32_1 = arith.constant 0 : i32
    return %c0_i32, %c0_i32_0 : i32, i32
  }
  func.func @transform_11(%arg0: i32) -> (i32, i32) {
    %c0_i32 = arith.constant 0 : i32
    %c0_i32_0 = arith.constant 0 : i32
    %c0_i32_1 = arith.constant 0 : i32
    return %c0_i32, %c0_i32_0 : i32, i32
  }
  func.func @transform_12(%arg0: i32) -> (i32, i32) {
    %c0_i32 = arith.constant 0 : i32
    %c0_i32_0 = arith.constant 0 : i32
    %c0_i32_1 = arith.constant 0 : i32
    return %c0_i32, %c0_i32_0 : i32, i32
  }
  func.func @transform_13(%arg0: i32) -> (i32, i32) {
    %c0_i32 = arith.constant 0 : i32
    %c0_i32_0 = arith.constant 0 : i32
    %c0_i32_1 = arith.constant 0 : i32
    return %c0_i32, %c0_i32_0 : i32, i32
  }
  func.func @transform_14(%arg0: i32) -> (i32, i32) {
    %c0_i32 = arith.constant 0 : i32
    %c0_i32_0 = arith.constant 0 : i32
    %c0_i32_1 = arith.constant 0 : i32
    return %c0_i32, %c0_i32_0 : i32, i32
  }
  func.func @transform_15(%arg0: i32) -> (i32, i32) {
    %c0_i32 = arith.constant 0 : i32
    %c0_i32_0 = arith.constant 0 : i32
    %c0_i32_1 = arith.constant 0 : i32
    return %c0_i32, %c0_i32_0 : i32, i32
  }
}

</mosaic_0001>

<llo_original>
// kernel: transformer_encoder_layer.1
$region0: #{transformer_encoder_layer.1}
  #allocation0 [shape = 'u32[]', space=smem, size = 0x4, offset = 0x4, fixed_abs, tag = 'smem constant byte address 0x4 - core index']
  #allocation1 [shape = 'u32[72,128]{1,0:T(1,128)}', space=vmem, size = 0x9000, scoped, tag = 'internal scratch']
  %s0 = inlined_call_operand.hbm [shape: f32[16,32], index: 0, kind: input, shape index: {}]
  %s1 = inlined_call_operand.vmem [shape: f32[1,32], index: 1, kind: input, shape index: {}]
  %s2 = inlined_call_operand.vmem [shape: f32[1,32], index: 2, kind: input, shape index: {}]
  %s3 = inlined_call_operand.vmem [shape: f32[32,96], index: 3, kind: input, shape index: {}]
  %s4 = inlined_call_operand.vmem [shape: f32[1,96], index: 4, kind: input, shape index: {}]
  %s5 = inlined_call_operand.vmem [shape: f32[32,32], index: 5, kind: input, shape index: {}]
  %s6 = inlined_call_operand.hbm [shape: f32[1,32], index: 6, kind: input, shape index: {}]
  %s7 = inlined_call_operand.vmem [shape: f32[1,32], index: 7, kind: input, shape index: {}]
  %s8 = inlined_call_operand.vmem [shape: f32[1,32], index: 8, kind: input, shape index: {}]
  %s9 = inlined_call_operand.vmem [shape: f32[32,64], index: 9, kind: input, shape index: {}]
  %s10 = inlined_call_operand.hbm [shape: f32[1,64], index: 10, kind: input, shape index: {}]
  %s11 = inlined_call_operand.vmem [shape: f32[64,32], index: 11, kind: input, shape index: {}]
  %s12 = inlined_call_operand.hbm [shape: f32[1,32], index: 12, kind: input, shape index: {}]
  %s13 = inlined_call_operand.hbm [shape: f32[32,128], index: 13, kind: input, shape index: {}]
  %s14 = inlined_call_operand.hbm [shape: f32[1,128], index: 14, kind: input, shape index: {}]
  %s15 = inlined_call_operand.hbm [shape: f32[16,128], index: 15, kind: output, shape index: {}]
  %s16 = sld [smem:[#allocation0]]
  $region94: #{transformer_encoder_layer.1} parent=0
    _
  %s18 = ssub.s32 1, %s16
  %s19 = scalar_select 0, %s18, %s16
  $region1: #{transformer_encoder_layer.1} parent=0
    #allocation2 [shape = 'u8[8192]{0}', space=vmem, size = 0x2000, scoped, tag = 'input window, operand 0, single buffered']
    #allocation3 [shape = 's32[1]{0}', space=sflag, size = 0x4, scoped, tag = 'scoped memory for transformer_encoder_layer.1']
    #allocation4 [shape = 's32[1]{0}', space=sflag, size = 0x4, scoped, tag = 'scoped memory for transformer_encoder_layer.1']
    #allocation5 [shape = 'u8[512]{0}', space=vmem, size = 0x400, scoped, tag = 'input window, operand 6, single buffered']
    #allocation6 [shape = 's32[1]{0}', space=sflag, size = 0x4, scoped, tag = 'scoped memory for transformer_encoder_layer.1']
    #allocation7 [shape = 'u8[512]{0}', space=vmem, size = 0x400, scoped, tag = 'input window, operand 10, single buffered']
    #allocation8 [shape = 'u8[512]{0}', space=vmem, size = 0x400, scoped, tag = 'input window, operand 12, single buffered']
    #allocation9 [shape = 's32[1]{0}', space=sflag, size = 0x4, scoped, tag = 'scoped memory for transformer_encoder_layer.1']
    #allocation10 [shape = 'u8[16384]{0}', space=vmem, size = 0x4000, scoped, tag = 'input window, operand 13, single buffered']
    #allocation11 [shape = 'u8[512]{0}', space=vmem, size = 0x400, scoped, tag = 'input window, operand 14, single buffered']
    #allocation12 [shape = 's32[1]{0}', space=sflag, size = 0x4, scoped, tag = 'scoped memory for transformer_encoder_layer.1']
    #allocation13 [shape = 'u8[8192]{0}', space=vmem, size = 0x2000, scoped, tag = 'output window, operand 0, single buffered']
    %20 = vsyncpa [#allocation3], 0
    %21 = vsyncpa [#allocation6], 0
    %22 = vsyncpa [#allocation9], 0
    %23 = vsyncpa [#allocation12], 0
    %24 = vsyncpa [#allocation4], 0
    // Predicated region
    $region2: #{transformer_encoder_layer.1} parent=1 // pred_check
      _
    $region3: #{transformer_encoder_layer.1} parent=1 // pred_check_branch
      %26 = sbr.rel (0) target = $region5
    $region4: #{transformer_encoder_layer.1} parent=1 // pred_region
      %28 = vsyncadd [#allocation3], 0
      %s29 = sshll.u32 %s0, 4
      %s30 = int_to_ptr.hbm [resolvable:$true] %s29
      %s31 = sshll.u32 [#allocation2], 4
      %s32 = int_to_ptr.vmem [resolvable:$true] %s31
      %37 = dma.hbm_to_vmem [thread:$0]  %s30, 256, %s32, [#allocation3], 128, 128, 8
    $region5: #{transformer_encoder_layer.1} parent=1 // pred_fallthru
      _
    // Predicated region
    $region6: #{transformer_encoder_layer.1} parent=1 // pred_check
      _
    $region7: #{transformer_encoder_layer.1} parent=1 // pred_check_branch
      %39 = sbr.rel (0) target = $region9
    $region8: #{transformer_encoder_layer.1} parent=1 // pred_region
      _
    $region9: #{transformer_encoder_layer.1} parent=1 // pred_fallthru
      _
    // Predicated region
    $region10: #{transformer_encoder_layer.1} parent=1 // pred_check
      _
    $region11: #{transformer_encoder_layer.1} parent=1 // pred_check_branch
      %41 = sbr.rel (0) target = $region13
    $region12: #{transformer_encoder_layer.1} parent=1 // pred_region
      _
    $region13: #{transformer_encoder_layer.1} parent=1 // pred_fallthru
      _
    // Predicated region
    $region14: #{transformer_encoder_layer.1} parent=1 // pred_check
      _
    $region15: #{transformer_encoder_layer.1} parent=1 // pred_check_branch
      %43 = sbr.rel (0) target = $region17
    $region16: #{transformer_encoder_layer.1} parent=1 // pred_region
      _
    $region17: #{transformer_encoder_layer.1} parent=1 // pred_fallthru
      _
    // Predicated region
    $region18: #{transformer_encoder_layer.1} parent=1 // pred_check
      _
    $region19: #{transformer_encoder_layer.1} parent=1 // pred_check_branch
      %45 = sbr.rel (0) target = $region21
    $region20: #{transformer_encoder_layer.1} parent=1 // pred_region
      _
    $region21: #{transformer_encoder_layer.1} parent=1 // pred_fallthru
      _
    // Predicated region
    $region22: #{transformer_encoder_layer.1} parent=1 // pred_check
      _
    $region23: #{transformer_encoder_layer.1} parent=1 // pred_check_branch
      %47 = sbr.rel (0) target = $region25
    $region24: #{transformer_encoder_layer.1} parent=1 // pred_region
      _
    $region25: #{transformer_encoder_layer.1} parent=1 // pred_fallthru
      _
    // Predicated region
    $region26: #{transformer_encoder_layer.1} parent=1 // pred_check
      _
    $region27: #{transformer_encoder_layer.1} parent=1 // pred_check_branch
      %49 = sbr.rel (0) target = $region29
    $region28: #{transformer_encoder_layer.1} parent=1 // pred_region
      %51 = vsyncadd [#allocation6], 0
      %s53 = sshll.u32 %s6, 4
      %s54 = int_to_ptr.hbm [resolvable:$true] %s53
      %s55 = sshll.u32 [#allocation5], 4
      %s56 = int_to_ptr.vmem [resolvable:$true] %s55
      %58 = dma.hbm_to_vmem [thread:$0]  %s54, 16, %s56, [#allocation6]
    $region29: #{transformer_encoder_layer.1} parent=1 // pred_fallthru
      _
    // Predicated region
    $region30: #{transformer_encoder_layer.1} parent=1 // pred_check
      _
    $region31: #{transformer_encoder_layer.1} parent=1 // pred_check_branch
      %60 = sbr.rel (0) target = $region33
    $region32: #{transformer_encoder_layer.1} parent=1 // pred_region
      _
    $region33: #{transformer_encoder_layer.1} parent=1 // pred_fallthru
      _
    // Predicated region
    $region34: #{transformer_encoder_layer.1} parent=1 // pred_check
      _
    $region35: #{transformer_encoder_layer.1} parent=1 // pred_check_branch
      %62 = sbr.rel (0) target = $region37
    $region36: #{transformer_encoder_layer.1} parent=1 // pred_region
      _
    $region37: #{transformer_encoder_layer.1} parent=1 // pred_fallthru
      _
    // Predicated region
    $region38: #{transformer_encoder_layer.1} parent=1 // pred_check
      _
    $region39: #{transformer_encoder_layer.1} parent=1 // pred_check_branch
      %64 = sbr.rel (0) target = $region41
    $region40: #{transformer_encoder_layer.1} parent=1 // pred_region
      _
    $region41: #{transformer_encoder_layer.1} parent=1 // pred_fallthru
      _
    // Predicated region
    $region42: #{transformer_encoder_layer.1} parent=1 // pred_check
      _
    $region43: #{transformer_encoder_layer.1} parent=1 // pred_check_branch
      %66 = sbr.rel (0) target = $region45
    $region44: #{transformer_encoder_layer.1} parent=1 // pred_region
      %68 = vsyncadd [#allocation6], 0
      %s70 = sshll.u32 %s10, 4
      %s71 = int_to_ptr.hbm [resolvable:$true] %s70
      %s72 = sshll.u32 [#allocation7], 4
      %s73 = int_to_ptr.vmem [resolvable:$true] %s72
      %75 = dma.hbm_to_vmem [thread:$0]  %s71, 16, %s73, [#allocation6]
    $region45: #{transformer_encoder_layer.1} parent=1 // pred_fallthru
      _
    // Predicated region
    $region46: #{transformer_encoder_layer.1} parent=1 // pred_check
      _
    $region47: #{transformer_encoder_layer.1} parent=1 // pred_check_branch
      %77 = sbr.rel (0) target = $region49
    $region48: #{transformer_encoder_layer.1} parent=1 // pred_region
      _
    $region49: #{transformer_encoder_layer.1} parent=1 // pred_fallthru
      _
    // Predicated region
    $region50: #{transformer_encoder_layer.1} parent=1 // pred_check
      _
    $region51: #{transformer_encoder_layer.1} parent=1 // pred_check_branch
      %79 = sbr.rel (0) target = $region53
    $region52: #{transformer_encoder_layer.1} parent=1 // pred_region
      %81 = vsyncadd [#allocation9], 0
      %s83 = sshll.u32 %s12, 4
      %s84 = int_to_ptr.hbm [resolvable:$true] %s83
      %s85 = sshll.u32 [#allocation8], 4
      %s86 = int_to_ptr.vmem [resolvable:$true] %s85
      %88 = dma.hbm_to_vmem [thread:$0]  %s84, 16, %s86, [#allocation9]
    $region53: #{transformer_encoder_layer.1} parent=1 // pred_fallthru
      _
    // Predicated region
    $region54: #{transformer_encoder_layer.1} parent=1 // pred_check
      _
    $region55: #{transformer_encoder_layer.1} parent=1 // pred_check_branch
      %90 = sbr.rel (0) target = $region57
    $region56: #{transformer_encoder_layer.1} parent=1 // pred_region
      %92 = vsyncadd [#allocation9], 0
      %s93 = sshll.u32 %s13, 4
      %s94 = int_to_ptr.hbm [resolvable:$true] %s93
      %s95 = sshll.u32 [#allocation10], 4
      %s96 = int_to_ptr.vmem [resolvable:$true] %s95
      %101 = dma.hbm_to_vmem [thread:$0]  %s94, 512, %s96, [#allocation9], 128, 128, 8
    $region57: #{transformer_encoder_layer.1} parent=1 // pred_fallthru
      _
    // Predicated region
    $region58: #{transformer_encoder_layer.1} parent=1 // pred_check
      _
    $region59: #{transformer_encoder_layer.1} parent=1 // pred_check_branch
      %103 = sbr.rel (0) target = $region61
    $region60: #{transformer_encoder_layer.1} parent=1 // pred_region
      %105 = vsyncadd [#allocation12], 0
      %s107 = sshll.u32 %s14, 4
      %s108 = int_to_ptr.hbm [resolvable:$true] %s107
      %s109 = sshll.u32 [#allocation11], 4
      %s110 = int_to_ptr.vmem [resolvable:$true] %s109
      %112 = dma.hbm_to_vmem [thread:$0]  %s108, 16, %s110, [#allocation12]
    $region61: #{transformer_encoder_layer.1} parent=1 // pred_fallthru
      _
    // Predicated region
    $region62: #{transformer_encoder_layer.1} parent=1 // pred_check
      _
    $region63: #{transformer_encoder_layer.1} parent=1 // pred_check_branch
      %114 = sbr.rel (0) target = $region65
    $region64: #{transformer_encoder_layer.1} parent=1 // pred_region
      %116 = dma.done [#allocation3], 256
    $region65: #{transformer_encoder_layer.1} parent=1 // pred_fallthru
      _
    // Predicated region
    $region66: #{transformer_encoder_layer.1} parent=1 // pred_check
      _
    $region67: #{transformer_encoder_layer.1} parent=1 // pred_check_branch
      %118 = sbr.rel (0) target = $region69
    $region68: #{transformer_encoder_layer.1} parent=1 // pred_region
      %120 = dma.done [#allocation6], 16
    $region69: #{transformer_encoder_layer.1} parent=1 // pred_fallthru
      _
    // Predicated region
    $region70: #{transformer_encoder_layer.1} parent=1 // pred_check
      _
    $region71: #{transformer_encoder_layer.1} parent=1 // pred_check_branch
      %122 = sbr.rel (0) target = $region73
    $region72: #{transformer_encoder_layer.1} parent=1 // pred_region
      %124 = dma.done [#allocation6], 16
    $region73: #{transformer_encoder_layer.1} parent=1 // pred_fallthru
      _
    // Predicated region
    $region74: #{transformer_encoder_layer.1} parent=1 // pred_check
      _
    $region75: #{transformer_encoder_layer.1} parent=1 // pred_check_branch
      %126 = sbr.rel (0) target = $region77
    $region76: #{transformer_encoder_layer.1} parent=1 // pred_region
      %128 = dma.done [#allocation9], 16
    $region77: #{transformer_encoder_layer.1} parent=1 // pred_fallthru
      _
    // Predicated region
    $region78: #{transformer_encoder_layer.1} parent=1 // pred_check
      _
    $region79: #{transformer_encoder_layer.1} parent=1 // pred_check_branch
      %130 = sbr.rel (0) target = $region81
    $region80: #{transformer_encoder_layer.1} parent=1 // pred_region
      %132 = dma.done [#allocation9], 512
    $region81: #{transformer_encoder_layer.1} parent=1 // pred_fallthru
      _
    // Predicated region
    $region82: #{transformer_encoder_layer.1} parent=1 // pred_check
      _
    $region83: #{transformer_encoder_layer.1} parent=1 // pred_check_branch
      %134 = sbr.rel (0) target = $region85
    $region84: #{transformer_encoder_layer.1} parent=1 // pred_region
      %136 = dma.done [#allocation12], 16
    $region85: #{transformer_encoder_layer.1} parent=1 // pred_fallthru
      _
    %v138 = vld [vmem:[#allocation2] sm:$0xff]
    %v139 = vld [vmem:[#allocation2 + $0x8] sm:$0xff]
    %v140 = vld [vmem:[%s1] sm:$0x1]
    %v141 = vld [vmem:[%s2] sm:$0x1]
    %vm142 = vcmask 261120
    %v143 = vsel %vm142, %v138, 0.0
    %144 = vadd.xlane.f32.xlu0 %v143
    %v145 = vpop.xlane.xlu0 %144
    %v146 = vsel %vm142, %v139, 0.0
    %147 = vadd.xlane.f32.xlu0 %v146
    %v148 = vpop.xlane.xlu0 %147
    %v149 = vrcp.pop 32.0
    %v150 = vmul.f32 32.0, %v149
    %v151 = vsub.f32 1.0, %v150
    %v152 = vmul.f32 %v149, %v151
    %v153 = vadd.f32 %v149, %v152
    %vm154 = vweird.f32 %v149
    %v155 = vsel %vm154, %v149, %v153
    %v156 = vmul.f32 %v145, %v155
    %v157 = vmul.f32 %v148, %v155
    %v158 = vsub.f32 %v138, %v156
    %v159 = vsub.f32 %v139, %v157
    %v160 = vmul.f32 %v158, %v158
    %v161 = vmul.f32 %v159, %v159
    %v162 = vsel %vm142, %v160, 0.0
    %163 = vadd.xlane.f32.xlu0 %v162
    %v164 = vpop.xlane.xlu0 %163
    %v165 = vsel %vm142, %v161, 0.0
    %166 = vadd.xlane.f32.xlu0 %v165
    %v167 = vpop.xlane.xlu0 %166
    %v168 = vmul.f32 %v164, %v155
    %v169 = vmul.f32 %v167, %v155
    %v170 = vadd.f32 %v168, 1e-05
    %v171 = vadd.f32 %v169, 1e-05
    %v172 = vrsqrt.pop %v170
    %v173 = vmul.f32 %v172, %v170
    %v174 = vmul.f32 %v173, %v172
    %v175 = vmul.f32 0.5, %v174
    %v176 = vsub.f32 1.5, %v175
    %v177 = vmul.f32 %v172, %v176
    %vm178 = vweird.f32 %v170
    %vm179 = vweird.f32 %v172
    %vm180 = vmor %vm178, %vm179
    %v181 = vsel %vm180, %v172, %v177
    %v182 = vrsqrt.pop %v171
    %v183 = vmul.f32 %v182, %v171
    %v184 = vmul.f32 %v183, %v182
    %v185 = vmul.f32 0.5, %v184
    %v186 = vsub.f32 1.5, %v185
    %v187 = vmul.f32 %v182, %v186
    %vm188 = vweird.f32 %v171
    %vm189 = vweird.f32 %v182
    %vm190 = vmor %vm188, %vm189
    %v191 = vsel %vm190, %v182, %v187
    %v192 = vmul.f32 %v158, %v181
    %v193 = vmul.f32 %v159, %v191
    %v195 = vperm.slane %v140, 0
    %v197 = vmul.f32 %v192, %v195
    %v198 = vmul.f32 %v193, %v195
    %v200 = vperm.slane %v141, 0
    %v202 = vadd.f32 %v197, %v200
    %v203 = vadd.f32 %v198, %v200
    %v204 = vld [vmem:[%s3] sm:$0xff]
    %v205 = vld [vmem:[%s3 + $0x8] sm:$0xff]
    %v206 = vld [vmem:[%s3 + $0x10] sm:$0xff]
    %v207 = vld [vmem:[%s3 + $0x18] sm:$0xff]
    %v208 = vpack.c.bf16 %v203, %v202
    %v209 = vpack.c.bf16 %v205, %v204
    %v210 = vpack.c.bf16 %v207, %v206
    %v211 = vld [vmem:[%s4] sm:$0x1]
    %v213 = vperm.slane %v211, 0
    %v216 = vsel %vm142, %v208, 0
    %218 = vmatpush.bf16.msra.mxu0 0
    %219 = vmatpush.bf16.msra.mxu0 0
    %220 = vmatpush.bf16.msra.mxu0 0
    %221 = vmatpush.bf16.msra.mxu0 0
    %222 = vmatpush.bf16.msra.mxu0 0
    %223 = vmatpush.bf16.msra.mxu0 0
    %224 = vmatpush.bf16.msra.mxu0 %v210
    %225 = vmatpush.bf16.msra.mxu0 %v209
    %226 = vmatmul.bf16.gmra.mxu0 %v216
    %v227 = vpop.f32.mrf.mxu0
    %v228 = vadd.f32 %v213, %v227
    %v229 = vpop.f32.mrf.mxu0
    %v230 = vadd.f32 %v213, %v229
    %231 = vdwg.mxu0
    %v232 = vpack.c.bf16 %v228, %v228
    %v233 = vpack.c.bf16 %v230, %v230
    %v235 = vunpack.c.l.b16 %v232
    %v236 = vpack.c.b16 %v235, %v235
    %237 = vrot.lane.b32.xlu0 %v236, 96
    %v238 = vpop.permute.xlu0 %237
    %vm239 = vcmask 64512
    %v241 = vsel %vm239, %v232, 0
    %v244 = vsel %vm239, %v238, 0
    %246 = vmatpush.bf16.xpose.msra.mxu0 0
    %247 = vmatpush.bf16.xpose.msra.mxu0 0
    %248 = vmatpush.bf16.xpose.msra.mxu0 0
    %249 = vmatpush.bf16.xpose.msra.mxu0 0
    %250 = vmatpush.bf16.xpose.msra.mxu0 0
    %251 = vmatpush.bf16.xpose.msra.mxu0 0
    %252 = vmatpush.bf16.xpose.msra.mxu0 0
    %253 = vmatpush.bf16.xpose.msra.mxu0 %v244
    %254 = vmatmul.bf16.gmra.mxu0 %v241
    %v255 = vpop.f32.mrf.mxu0
    %v256 = vadd.f32 0.0, %v255
    %v257 = vpop.f32.mrf.mxu0
    %258 = vdwg.mxu0
    %v260 = vunpack.c.l.b16 %v233
    %v261 = vpack.c.b16 %v260, %v260
    %262 = vrot.lane.b32.xlu0 %v261, 96
    %v263 = vpop.permute.xlu0 %262
    %v265 = vsel %vm239, %v233, 0
    %v268 = vsel %vm239, %v263, 0
    %270 = vmatpush.bf16.xpose.msra.mxu0 0
    %271 = vmatpush.bf16.xpose.msra.mxu0 0
    %272 = vmatpush.bf16.xpose.msra.mxu0 0
    %273 = vmatpush.bf16.xpose.msra.mxu0 0
    %274 = vmatpush.bf16.xpose.msra.mxu0 0
    %275 = vmatpush.bf16.xpose.msra.mxu0 0
    %276 = vmatpush.bf16.xpose.msra.mxu0 0
    %277 = vmatpush.bf16.xpose.msra.mxu0 %v268
    %278 = vmatmul.bf16.gmra.mxu0 %v265
    %v279 = vpop.f32.mrf.mxu0
    %v280 = vadd.f32 0.0, %v279
    %v281 = vpop.f32.mrf.mxu0
    %282 = vdwg.mxu0
    %v283 = vmul.f32 %v256, 0.35355338
    %v284 = vmul.f32 %v280, 0.35355338
    %v285 = vsel %vm239, %v283, -inf
    %v286 = vrot.slane %v285, 4
    %v287 = vmax.f32 %v285, %v286
    %v288 = vrot.slane %v287, 2
    %v289 = vmax.f32 %v287, %v288
    %v290 = vrot.slane %v289, 1
    %v291 = vmax.f32 %v289, %v290
    %v292 = vsel %vm239, %v284, -inf
    %v293 = vrot.slane %v292, 4
    %v294 = vmax.f32 %v292, %v293
    %v295 = vrot.slane %v294, 2
    %v296 = vmax.f32 %v294, %v295
    %v297 = vrot.slane %v296, 1
    %v298 = vmax.f32 %v296, %v297
    %v299 = vsub.f32 %v283, %v291
    %v300 = vsub.f32 %v284, %v298
    %v301 = vmul.f32 %v299, 1.442695
    %v302 = vpow.pop %v301
    %v303 = vmul.f32 %v300, 1.442695
    %v304 = vpow.pop %v303
    %v305 = vsel %vm239, %v302, 0.0
    %v306 = vrot.slane %v305, 4
    %v307 = vadd.f32 %v305, %v306
    %v308 = vrot.slane %v307, 2
    %v309 = vadd.f32 %v307, %v308
    %v310 = vrot.slane %v309, 1
    %v311 = vadd.f32 %v309, %v310
    %v312 = vsel %vm239, %v304, 0.0
    %v313 = vrot.slane %v312, 4
    %v314 = vadd.f32 %v312, %v313
    %v315 = vrot.slane %v314, 2
    %v316 = vadd.f32 %v314, %v315
    %v317 = vrot.slane %v316, 1
    %v318 = vadd.f32 %v316, %v317
    %v319 = vrcp.pop %v311
    %v320 = vrcp.pop %v318
    %v321 = vmul.f32 %v302, %v319
    %v322 = vmul.f32 %v304, %v320
    %v323 = vpack.c.bf16 %v321, %v321
    %v324 = vpack.c.bf16 %v322, %v322
    %325 = vrot.lane.b32.xlu0 %v236, 64
    %v326 = vpop.permute.xlu0 %325
    %v328 = vsel %vm239, %v323, 0
    %vm330 = vcmask 1043456
    %v332 = vsel %vm330, %v326, 0
    %334 = vmatpush.bf16.msra.mxu0 0
    %335 = vmatpush.bf16.msra.mxu0 0
    %336 = vmatpush.bf16.msra.mxu0 0
    %337 = vmatpush.bf16.msra.mxu0 0
    %338 = vmatpush.bf16.msra.mxu0 0
    %339 = vmatpush.bf16.msra.mxu0 0
    %340 = vmatpush.bf16.msra.mxu0 0
    %341 = vmatpush.bf16.msra.mxu0 %v332
    %342 = vmatmul.bf16.gmra.mxu0 %v328
    %v343 = vpop.f32.mrf.mxu0
    %v344 = vadd.f32 0.0, %v343
    %v345 = vpop.f32.mrf.mxu0
    %346 = vdwg.mxu0
    %347 = vrot.lane.b32.xlu0 %v261, 64
    %v348 = vpop.permute.xlu0 %347
    %v350 = vsel %vm239, %v324, 0
    %v353 = vsel %vm330, %v348, 0
    %355 = vmatpush.bf16.msra.mxu0 0
    %356 = vmatpush.bf16.msra.mxu0 0
    %357 = vmatpush.bf16.msra.mxu0 0
    %358 = vmatpush.bf16.msra.mxu0 0
    %359 = vmatpush.bf16.msra.mxu0 0
    %360 = vmatpush.bf16.msra.mxu0 0
    %361 = vmatpush.bf16.msra.mxu0 0
    %362 = vmatpush.bf16.msra.mxu0 %v353
    %363 = vmatmul.bf16.gmra.mxu0 %v350
    %v364 = vpop.f32.mrf.mxu0
    %v365 = vadd.f32 0.0, %v364
    %v366 = vpop.f32.mrf.mxu0
    %367 = vdwg.mxu0
    %368 = vrot.lane.b32.xlu0 %v236, 120
    %v369 = vpop.permute.xlu0 %368
    %370 = vrot.lane.b32.xlu0 %v236, 88
    %v371 = vpop.permute.xlu0 %370
    %v373 = vsel %vm239, %v369, 0
    %v376 = vsel %vm239, %v371, 0
    %378 = vmatpush.bf16.xpose.msra.mxu0 0
    %379 = vmatpush.bf16.xpose.msra.mxu0 0
    %380 = vmatpush.bf16.xpose.msra.mxu0 0
    %381 = vmatpush.bf16.xpose.msra.mxu0 0
    %382 = vmatpush.bf16.xpose.msra.mxu0 0
    %383 = vmatpush.bf16.xpose.msra.mxu0 0
    %384 = vmatpush.bf16.xpose.msra.mxu0 0
    %385 = vmatpush.bf16.xpose.msra.mxu0 %v376
    %386 = vmatmul.bf16.gmra.mxu0 %v373
    %v387 = vpop.f32.mrf.mxu0
    %v388 = vadd.f32 0.0, %v387
    %v389 = vpop.f32.mrf.mxu0
    %390 = vdwg.mxu0
    %391 = vrot.lane.b32.xlu0 %v261, 120
    %v392 = vpop.permute.xlu0 %391
    %393 = vrot.lane.b32.xlu0 %v261, 88
    %v394 = vpop.permute.xlu0 %393
    %v396 = vsel %vm239, %v392, 0
    %v399 = vsel %vm239, %v394, 0
    %401 = vmatpush.bf16.xpose.msra.mxu0 0
    %402 = vmatpush.bf16.xpose.msra.mxu0 0
    %403 = vmatpush.bf16.xpose.msra.mxu0 0
    %404 = vmatpush.bf16.xpose.msra.mxu0 0
    %405 = vmatpush.bf16.xpose.msra.mxu0 0
    %406 = vmatpush.bf16.xpose.msra.mxu0 0
    %407 = vmatpush.bf16.xpose.msra.mxu0 0
    %408 = vmatpush.bf16.xpose.msra.mxu0 %v399
    %409 = vmatmul.bf16.gmra.mxu0 %v396
    %v410 = vpop.f32.mrf.mxu0
    %v411 = vadd.f32 0.0, %v410
    %v412 = vpop.f32.mrf.mxu0
    %413 = vdwg.mxu0
    %v414 = vmul.f32 %v388, 0.35355338
    %v415 = vmul.f32 %v411, 0.35355338
    %v416 = vsel %vm239, %v414, -inf
    %v417 = vrot.slane %v416, 4
    %v418 = vmax.f32 %v416, %v417
    %v419 = vrot.slane %v418, 2
    %v420 = vmax.f32 %v418, %v419
    %v421 = vrot.slane %v420, 1
    %v422 = vmax.f32 %v420, %v421
    %v423 = vsel %vm239, %v415, -inf
    %v424 = vrot.slane %v423, 4
    %v425 = vmax.f32 %v423, %v424
    %v426 = vrot.slane %v425, 2
    %v427 = vmax.f32 %v425, %v426
    %v428 = vrot.slane %v427, 1
    %v429 = vmax.f32 %v427, %v428
    %v430 = vsub.f32 %v414, %v422
    %v431 = vsub.f32 %v415, %v429
    %v432 = vmul.f32 %v430, 1.442695
    %v433 = vpow.pop %v432
    %v434 = vmul.f32 %v431, 1.442695
    %v435 = vpow.pop %v434
    %v436 = vsel %vm239, %v433, 0.0
    %v437 = vrot.slane %v436, 4
    %v438 = vadd.f32 %v436, %v437
    %v439 = vrot.slane %v438, 2
    %v440 = vadd.f32 %v438, %v439
    %v441 = vrot.slane %v440, 1
    %v442 = vadd.f32 %v440, %v441
    %v443 = vsel %vm239, %v435, 0.0
    %v444 = vrot.slane %v443, 4
    %v445 = vadd.f32 %v443, %v444
    %v446 = vrot.slane %v445, 2
    %v447 = vadd.f32 %v445, %v446
    %v448 = vrot.slane %v447, 1
    %v449 = vadd.f32 %v447, %v448
    %v450 = vrcp.pop %v442
    %v451 = vrcp.pop %v449
    %v452 = vmul.f32 %v433, %v450
    %v453 = vmul.f32 %v435, %v451
    %v454 = vpack.c.bf16 %v452, %v452
    %v455 = vpack.c.bf16 %v453, %v453
    %456 = vrot.lane.b32.xlu0 %v236, 56
    %v457 = vpop.permute.xlu0 %456
    %v459 = vsel %vm239, %v454, 0
    %v462 = vsel %vm330, %v457, 0
    %464 = vmatpush.bf16.msra.mxu0 0
    %465 = vmatpush.bf16.msra.mxu0 0
    %466 = vmatpush.bf16.msra.mxu0 0
    %467 = vmatpush.bf16.msra.mxu0 0
    %468 = vmatpush.bf16.msra.mxu0 0
    %469 = vmatpush.bf16.msra.mxu0 0
    %470 = vmatpush.bf16.msra.mxu0 0
    %471 = vmatpush.bf16.msra.mxu0 %v462
    %472 = vmatmul.bf16.gmra.mxu0 %v459
    %v473 = vpop.f32.mrf.mxu0
    %v474 = vadd.f32 0.0, %v473
    %v475 = vpop.f32.mrf.mxu0
    %476 = vdwg.mxu0
    %477 = vrot.lane.b32.xlu0 %v261, 56
    %v478 = vpop.permute.xlu0 %477
    %v480 = vsel %vm239, %v455, 0
    %v483 = vsel %vm330, %v478, 0
    %485 = vmatpush.bf16.msra.mxu0 0
    %486 = vmatpush.bf16.msra.mxu0 0
    %487 = vmatpush.bf16.msra.mxu0 0
    %488 = vmatpush.bf16.msra.mxu0 0
    %489 = vmatpush.bf16.msra.mxu0 0
    %490 = vmatpush.bf16.msra.mxu0 0
    %491 = vmatpush.bf16.msra.mxu0 0
    %492 = vmatpush.bf16.msra.mxu0 %v483
    %493 = vmatmul.bf16.gmra.mxu0 %v480
    %v494 = vpop.f32.mrf.mxu0
    %v495 = vadd.f32 0.0, %v494
    %v496 = vpop.f32.mrf.mxu0
    %497 = vdwg.mxu0
    %498 = vrot.lane.b32.xlu0 %v236, 112
    %v499 = vpop.permute.xlu0 %498
    %500 = vrot.lane.b32.xlu0 %v236, 80
    %v501 = vpop.permute.xlu0 %500
    %v503 = vsel %vm239, %v499, 0
    %v506 = vsel %vm239, %v501, 0
    %508 = vmatpush.bf16.xpose.msra.mxu0 0
    %509 = vmatpush.bf16.xpose.msra.mxu0 0
    %510 = vmatpush.bf16.xpose.msra.mxu0 0
    %511 = vmatpush.bf16.xpose.msra.mxu0 0
    %512 = vmatpush.bf16.xpose.msra.mxu0 0
    %513 = vmatpush.bf16.xpose.msra.mxu0 0
    %514 = vmatpush.bf16.xpose.msra.mxu0 0
    %515 = vmatpush.bf16.xpose.msra.mxu0 %v506
    %516 = vmatmul.bf16.gmra.mxu0 %v503
    %v517 = vpop.f32.mrf.mxu0
    %v518 = vadd.f32 0.0, %v517
    %v519 = vpop.f32.mrf.mxu0
    %520 = vdwg.mxu0
    %521 = vrot.lane.b32.xlu0 %v261, 112
    %v522 = vpop.permute.xlu0 %521
    %523 = vrot.lane.b32.xlu0 %v261, 80
    %v524 = vpop.permute.xlu0 %523
    %v526 = vsel %vm239, %v522, 0
    %v529 = vsel %vm239, %v524, 0
    %531 = vmatpush.bf16.xpose.msra.mxu0 0
    %532 = vmatpush.bf16.xpose.msra.mxu0 0
    %533 = vmatpush.bf16.xpose.msra.mxu0 0
    %534 = vmatpush.bf16.xpose.msra.mxu0 0
    %535 = vmatpush.bf16.xpose.msra.mxu0 0
    %536 = vmatpush.bf16.xpose.msra.mxu0 0
    %537 = vmatpush.bf16.xpose.msra.mxu0 0
    %538 = vmatpush.bf16.xpose.msra.mxu0 %v529
    %539 = vmatmul.bf16.gmra.mxu0 %v526
    %v540 = vpop.f32.mrf.mxu0
    %v541 = vadd.f32 0.0, %v540
    %v542 = vpop.f32.mrf.mxu0
    %543 = vdwg.mxu0
    %v544 = vmul.f32 %v518, 0.35355338
    %v545 = vmul.f32 %v541, 0.35355338
    %v546 = vsel %vm239, %v544, -inf
    %v547 = vrot.slane %v546, 4
    %v548 = vmax.f32 %v546, %v547
    %v549 = vrot.slane %v548, 2
    %v550 = vmax.f32 %v548, %v549
    %v551 = vrot.slane %v550, 1
    %v552 = vmax.f32 %v550, %v551
    %v553 = vsel %vm239, %v545, -inf
    %v554 = vrot.slane %v553, 4
    %v555 = vmax.f32 %v553, %v554
    %v556 = vrot.slane %v555, 2
    %v557 = vmax.f32 %v555, %v556
    %v558 = vrot.slane %v557, 1
    %v559 = vmax.f32 %v557, %v558
    %v560 = vsub.f32 %v544, %v552
    %v561 = vsub.f32 %v545, %v559
    %v562 = vmul.f32 %v560, 1.442695
    %v563 = vpow.pop %v562
    %v564 = vmul.f32 %v561, 1.442695
    %v565 = vpow.pop %v564
    %v566 = vsel %vm239, %v563, 0.0
    %v567 = vrot.slane %v566, 4
    %v568 = vadd.f32 %v566, %v567
    %v569 = vrot.slane %v568, 2
    %v570 = vadd.f32 %v568, %v569
    %v571 = vrot.slane %v570, 1
    %v572 = vadd.f32 %v570, %v571
    %v573 = vsel %vm239, %v565, 0.0
    %v574 = vrot.slane %v573, 4
    %v575 = vadd.f32 %v573, %v574
    %v576 = vrot.slane %v575, 2
    %v577 = vadd.f32 %v575, %v576
    %v578 = vrot.slane %v577, 1
    %v579 = vadd.f32 %v577, %v578
    %v580 = vrcp.pop %v572
    %v581 = vrcp.pop %v579
    %v582 = vmul.f32 %v563, %v580
    %v583 = vmul.f32 %v565, %v581
    %v584 = vpack.c.bf16 %v582, %v582
    %v585 = vpack.c.bf16 %v583, %v583
    %586 = vrot.lane.b32.xlu0 %v236, 48
    %v587 = vpop.permute.xlu0 %586
    %v589 = vsel %vm239, %v584, 0
    %v592 = vsel %vm330, %v587, 0
    %594 = vmatpush.bf16.msra.mxu0 0
    %595 = vmatpush.bf16.msra.mxu0 0
    %596 = vmatpush.bf16.msra.mxu0 0
    %597 = vmatpush.bf16.msra.mxu0 0
    %598 = vmatpush.bf16.msra.mxu0 0
    %599 = vmatpush.bf16.msra.mxu0 0
    %600 = vmatpush.bf16.msra.mxu0 0
    %601 = vmatpush.bf16.msra.mxu0 %v592
    %602 = vmatmul.bf16.gmra.mxu0 %v589
    %v603 = vpop.f32.mrf.mxu0
    %v604 = vadd.f32 0.0, %v603
    %v605 = vpop.f32.mrf.mxu0
    %606 = vdwg.mxu0
    %607 = vrot.lane.b32.xlu0 %v261, 48
    %v608 = vpop.permute.xlu0 %607
    %v610 = vsel %vm239, %v585, 0
    %v613 = vsel %vm330, %v608, 0
    %615 = vmatpush.bf16.msra.mxu0 0
    %616 = vmatpush.bf16.msra.mxu0 0
    %617 = vmatpush.bf16.msra.mxu0 0
    %618 = vmatpush.bf16.msra.mxu0 0
    %619 = vmatpush.bf16.msra.mxu0 0
    %620 = vmatpush.bf16.msra.mxu0 0
    %621 = vmatpush.bf16.msra.mxu0 0
    %622 = vmatpush.bf16.msra.mxu0 %v613
    %623 = vmatmul.bf16.gmra.mxu0 %v610
    %v624 = vpop.f32.mrf.mxu0
    %v625 = vadd.f32 0.0, %v624
    %v626 = vpop.f32.mrf.mxu0
    %627 = vdwg.mxu0
    %628 = vrot.lane.b32.xlu0 %v236, 104
    %v629 = vpop.permute.xlu0 %628
    %630 = vrot.lane.b32.xlu0 %v236, 72
    %v631 = vpop.permute.xlu0 %630
    %v633 = vsel %vm239, %v629, 0
    %v636 = vsel %vm239, %v631, 0
    %638 = vmatpush.bf16.xpose.msra.mxu0 0
    %639 = vmatpush.bf16.xpose.msra.mxu0 0
    %640 = vmatpush.bf16.xpose.msra.mxu0 0
    %641 = vmatpush.bf16.xpose.msra.mxu0 0
    %642 = vmatpush.bf16.xpose.msra.mxu0 0
    %643 = vmatpush.bf16.xpose.msra.mxu0 0
    %644 = vmatpush.bf16.xpose.msra.mxu0 0
    %645 = vmatpush.bf16.xpose.msra.mxu0 %v636
    %646 = vmatmul.bf16.gmra.mxu0 %v633
    %v647 = vpop.f32.mrf.mxu0
    %v648 = vadd.f32 0.0, %v647
    %v649 = vpop.f32.mrf.mxu0
    %650 = vdwg.mxu0
    %651 = vrot.lane.b32.xlu0 %v261, 104
    %v652 = vpop.permute.xlu0 %651
    %653 = vrot.lane.b32.xlu0 %v261, 72
    %v654 = vpop.permute.xlu0 %653
    %v656 = vsel %vm239, %v652, 0
    %v659 = vsel %vm239, %v654, 0
    %661 = vmatpush.bf16.xpose.msra.mxu0 0
    %662 = vmatpush.bf16.xpose.msra.mxu0 0
    %663 = vmatpush.bf16.xpose.msra.mxu0 0
    %664 = vmatpush.bf16.xpose.msra.mxu0 0
    %665 = vmatpush.bf16.xpose.msra.mxu0 0
    %666 = vmatpush.bf16.xpose.msra.mxu0 0
    %667 = vmatpush.bf16.xpose.msra.mxu0 0
    %668 = vmatpush.bf16.xpose.msra.mxu0 %v659
    %669 = vmatmul.bf16.gmra.mxu0 %v656
    %v670 = vpop.f32.mrf.mxu0
    %v671 = vadd.f32 0.0, %v670
    %v672 = vpop.f32.mrf.mxu0
    %673 = vdwg.mxu0
    %v674 = vmul.f32 %v648, 0.35355338
    %v675 = vmul.f32 %v671, 0.35355338
    %v676 = vsel %vm239, %v674, -inf
    %v677 = vrot.slane %v676, 4
    %v678 = vmax.f32 %v676, %v677
    %v679 = vrot.slane %v678, 2
    %v680 = vmax.f32 %v678, %v679
    %v681 = vrot.slane %v680, 1
    %v682 = vmax.f32 %v680, %v681
    %v683 = vsel %vm239, %v675, -inf
    %v684 = vrot.slane %v683, 4
    %v685 = vmax.f32 %v683, %v684
    %v686 = vrot.slane %v685, 2
    %v687 = vmax.f32 %v685, %v686
    %v688 = vrot.slane %v687, 1
    %v689 = vmax.f32 %v687, %v688
    %v690 = vsub.f32 %v674, %v682
    %v691 = vsub.f32 %v675, %v689
    %v692 = vmul.f32 %v690, 1.442695
    %v693 = vpow.pop %v692
    %v694 = vmul.f32 %v691, 1.442695
    %v695 = vpow.pop %v694
    %v696 = vsel %vm239, %v693, 0.0
    %v697 = vrot.slane %v696, 4
    %v698 = vadd.f32 %v696, %v697
    %v699 = vrot.slane %v698, 2
    %v700 = vadd.f32 %v698, %v699
    %v701 = vrot.slane %v700, 1
    %v702 = vadd.f32 %v700, %v701
    %v703 = vsel %vm239, %v695, 0.0
    %v704 = vrot.slane %v703, 4
    %v705 = vadd.f32 %v703, %v704
    %v706 = vrot.slane %v705, 2
    %v707 = vadd.f32 %v705, %v706
    %v708 = vrot.slane %v707, 1
    %v709 = vadd.f32 %v707, %v708
    %v710 = vrcp.pop %v702
    %v711 = vrcp.pop %v709
    %v712 = vmul.f32 %v693, %v710
    %v713 = vmul.f32 %v695, %v711
    %v714 = vpack.c.bf16 %v712, %v712
    %v715 = vpack.c.bf16 %v713, %v713
    %716 = vrot.lane.b32.xlu0 %v236, 40
    %v717 = vpop.permute.xlu0 %716
    %v719 = vsel %vm239, %v714, 0
    %v722 = vsel %vm330, %v717, 0
    %724 = vmatpush.bf16.msra.mxu0 0
    %725 = vmatpush.bf16.msra.mxu0 0
    %726 = vmatpush.bf16.msra.mxu0 0
    %727 = vmatpush.bf16.msra.mxu0 0
    %728 = vmatpush.bf16.msra.mxu0 0
    %729 = vmatpush.bf16.msra.mxu0 0
    %730 = vmatpush.bf16.msra.mxu0 0
    %731 = vmatpush.bf16.msra.mxu0 %v722
    %732 = vmatmul.bf16.gmra.mxu0 %v719
    %v733 = vpop.f32.mrf.mxu0
    %v734 = vadd.f32 0.0, %v733
    %v735 = vpop.f32.mrf.mxu0
    %736 = vdwg.mxu0
    %737 = vrot.lane.b32.xlu0 %v261, 40
    %v738 = vpop.permute.xlu0 %737
    %v740 = vsel %vm239, %v715, 0
    %v743 = vsel %vm330, %v738, 0
    %745 = vmatpush.bf16.msra.mxu0 0
    %746 = vmatpush.bf16.msra.mxu0 0
    %747 = vmatpush.bf16.msra.mxu0 0
    %748 = vmatpush.bf16.msra.mxu0 0
    %749 = vmatpush.bf16.msra.mxu0 0
    %750 = vmatpush.bf16.msra.mxu0 0
    %751 = vmatpush.bf16.msra.mxu0 0
    %752 = vmatpush.bf16.msra.mxu0 %v743
    %753 = vmatmul.bf16.gmra.mxu0 %v740
    %v754 = vpop.f32.mrf.mxu0
    %v755 = vadd.f32 0.0, %v754
    %v756 = vpop.f32.mrf.mxu0
    %757 = vdwg.mxu0
    %760 = vrot.lane.b32.xlu0 %v474, 8
    %v761 = vpop.permute.xlu0 %760
    %762 = vrot.lane.b32.xlu0 %v495, 8
    %v763 = vpop.permute.xlu0 %762
    %768 = vrot.lane.b32.xlu0 %v604, 16
    %v769 = vpop.permute.xlu0 %768
    %770 = vrot.lane.b32.xlu0 %v625, 16
    %v771 = vpop.permute.xlu0 %770
    %776 = vrot.lane.b32.xlu0 %v734, 24
    %v777 = vpop.permute.xlu0 %776
    %778 = vrot.lane.b32.xlu0 %v755, 24
    %v779 = vpop.permute.xlu0 %778
    %v782 = vsel %vm239, %v344, %v761
    %v783 = vsel %vm239, %v365, %v763
    %vm784 = vcmask 130048
    %v785 = vsel %vm784, %v782, %v769
    %v786 = vsel %vm784, %v783, %v771
    %vm787 = vcmask 195584
    %v788 = vsel %vm787, %v785, %v777
    %v789 = vsel %vm787, %v786, %v779
    %v790 = vld [vmem:[%s5] sm:$0xff]
    %v791 = vld [vmem:[%s5 + $0x8] sm:$0xff]
    %v792 = vld [vmem:[%s5 + $0x10] sm:$0xff]
    %v793 = vld [vmem:[%s5 + $0x18] sm:$0xff]
    %v794 = vpack.c.bf16 %v789, %v788
    %v795 = vpack.c.bf16 %v791, %v790
    %v796 = vpack.c.bf16 %v793, %v792
    %v798 = vsel %vm142, %v794, 0
    %800 = vmatpush.bf16.msra.mxu0 0
    %801 = vmatpush.bf16.msra.mxu0 0
    %802 = vmatpush.bf16.msra.mxu0 0
    %803 = vmatpush.bf16.msra.mxu0 0
    %804 = vmatpush.bf16.msra.mxu0 0
    %805 = vmatpush.bf16.msra.mxu0 0
    %806 = vmatpush.bf16.msra.mxu0 %v796
    %807 = vmatpush.bf16.msra.mxu0 %v795
    %808 = vmatmul.bf16.gmra.mxu0 %v798
    %v809 = vpop.f32.mrf.mxu0
    %v810 = vadd.f32 0.0, %v809
    %v811 = vpop.f32.mrf.mxu0
    %v812 = vadd.f32 0.0, %v811
    %813 = vdwg.mxu0
    %v814 = vadd.f32 %v138, %v810
    %v815 = vadd.f32 %v139, %v812
    %v816 = vld [vmem:[#allocation5] sm:$0x1]
    %v818 = vperm.slane %v816, 0
    %v820 = vadd.f32 %v814, %v818
    %v821 = vadd.f32 %v815, %v818
    %v822 = vld [vmem:[%s7] sm:$0x1]
    %v823 = vld [vmem:[%s8] sm:$0x1]
    %v824 = vsel %vm142, %v820, 0.0
    %825 = vadd.xlane.f32.xlu0 %v824
    %v826 = vpop.xlane.xlu0 %825
    %v827 = vsel %vm142, %v821, 0.0
    %828 = vadd.xlane.f32.xlu0 %v827
    %v829 = vpop.xlane.xlu0 %828
    %v830 = vmul.f32 %v826, %v155
    %v831 = vmul.f32 %v829, %v155
    %v832 = vsub.f32 %v820, %v830
    %v833 = vsub.f32 %v821, %v831
    %v834 = vmul.f32 %v832, %v832
    %v835 = vmul.f32 %v833, %v833
    %v836 = vsel %vm142, %v834, 0.0
    %837 = vadd.xlane.f32.xlu0 %v836
    %v838 = vpop.xlane.xlu0 %837
    %v839 = vsel %vm142, %v835, 0.0
    %840 = vadd.xlane.f32.xlu0 %v839
    %v841 = vpop.xlane.xlu0 %840
    %v842 = vmul.f32 %v838, %v155
    %v843 = vmul.f32 %v841, %v155
    %v844 = vadd.f32 %v842, 1e-05
    %v845 = vadd.f32 %v843, 1e-05
    %v846 = vrsqrt.pop %v844
    %v847 = vmul.f32 %v846, %v844
    %v848 = vmul.f32 %v847, %v846
    %v849 = vmul.f32 0.5, %v848
    %v850 = vsub.f32 1.5, %v849
    %v851 = vmul.f32 %v846, %v850
    %vm852 = vweird.f32 %v844
    %vm853 = vweird.f32 %v846
    %vm854 = vmor %vm852, %vm853
    %v855 = vsel %vm854, %v846, %v851
    %v856 = vrsqrt.pop %v845
    %v857 = vmul.f32 %v856, %v845
    %v858 = vmul.f32 %v857, %v856
    %v859 = vmul.f32 0.5, %v858
    %v860 = vsub.f32 1.5, %v859
    %v861 = vmul.f32 %v856, %v860
    %vm862 = vweird.f32 %v845
    %vm863 = vweird.f32 %v856
    %vm864 = vmor %vm862, %vm863
    %v865 = vsel %vm864, %v856, %v861
    %v866 = vmul.f32 %v832, %v855
    %v867 = vmul.f32 %v833, %v865
    %v869 = vperm.slane %v822, 0
    %v871 = vmul.f32 %v866, %v869
    %v872 = vmul.f32 %v867, %v869
    %v874 = vperm.slane %v823, 0
    %v876 = vadd.f32 %v871, %v874
    %v877 = vadd.f32 %v872, %v874
    %v878 = vld [vmem:[%s9] sm:$0xff]
    %v879 = vld [vmem:[%s9 + $0x8] sm:$0xff]
    %v880 = vld [vmem:[%s9 + $0x10] sm:$0xff]
    %v881 = vld [vmem:[%s9 + $0x18] sm:$0xff]
    %v882 = vpack.c.bf16 %v877, %v876
    %v883 = vpack.c.bf16 %v879, %v878
    %v884 = vpack.c.bf16 %v881, %v880
    %v885 = vld [vmem:[#allocation7] sm:$0x1]
    %v887 = vperm.slane %v885, 0
    %v890 = vsel %vm142, %v882, 0
    %892 = vmatpush.bf16.msra.mxu0 0
    %893 = vmatpush.bf16.msra.mxu0 0
    %894 = vmatpush.bf16.msra.mxu0 0
    %895 = vmatpush.bf16.msra.mxu0 0
    %896 = vmatpush.bf16.msra.mxu0 0
    %897 = vmatpush.bf16.msra.mxu0 0
    %898 = vmatpush.bf16.msra.mxu0 %v884
    %899 = vmatpush.bf16.msra.mxu0 %v883
    %900 = vmatmul.bf16.gmra.mxu0 %v890
    %v901 = vpop.f32.mrf.mxu0
    %v902 = vadd.f32 %v887, %v901
    %v903 = vpop.f32.mrf.mxu0
    %v904 = vadd.f32 %v887, %v903
    %905 = vdwg.mxu0
    %v906 = vmul.f32 %v902, 0.5
    %v907 = vmul.f32 %v904, 0.5
    %v908 = vmul.f32 %v902, 0.70710677
    %v909 = vmul.f32 %v904, 0.70710677
    %v910 = vand.u32 2147483647, %v908
    %v911 = vand.u32 2147483647, %v909
    %v912 = vmul.f32 %v910, 0.3275911
    %v913 = vmul.f32 %v911, 0.3275911
    %v914 = vadd.f32 %v912, 1.0
    %v915 = vadd.f32 %v913, 1.0
    %v916 = vrcp.pop %v914
    %v917 = vmul.f32 %v914, %v916
    %v918 = vsub.f32 1.0, %v917
    %v919 = vmul.f32 %v916, %v918
    %v920 = vadd.f32 %v916, %v919
    %vm921 = vweird.f32 %v914
    %vm922 = vweird.f32 %v916
    %vm923 = vmor %vm921, %vm922
    %v924 = vsel %vm923, %v916, %v920
    %v925 = vand.u32 2147483647, %v914
    %vm926 = vcmp.eq.f32.partialorder %v925, 8.507059e+37
    %v927 = vand.u32 %v914, 2147483648
    %v928 = vor.u32 1.1754944e-38, %v927
    %v929 = vsel %vm926, %v928, %v924
    %v930 = vmul.f32 1.0, %v929
    %v931 = vrcp.pop %v915
    %v932 = vmul.f32 %v915, %v931
    %v933 = vsub.f32 1.0, %v932
    %v934 = vmul.f32 %v931, %v933
    %v935 = vadd.f32 %v931, %v934
    %vm936 = vweird.f32 %v915
    %vm937 = vweird.f32 %v931
    %vm938 = vmor %vm936, %vm937
    %v939 = vsel %vm938, %v931, %v935
    %v940 = vand.u32 2147483647, %v915
    %vm941 = vcmp.eq.f32.partialorder %v940, 8.507059e+37
    %v942 = vand.u32 %v915, 2147483648
    %v943 = vor.u32 1.1754944e-38, %v942
    %v944 = vsel %vm941, %v943, %v939
    %v945 = vmul.f32 1.0, %v944
    %v946 = vmul.f32 %v930, 1.0614054
    %v947 = vmul.f32 %v945, 1.0614054
    %v948 = vadd.f32 %v946, -1.4531521
    %v949 = vadd.f32 %v947, -1.4531521
    %v950 = vmul.f32 %v948, %v930
    %v951 = vmul.f32 %v949, %v945
    %v952 = vadd.f32 %v950, 1.4214138
    %v953 = vadd.f32 %v951, 1.4214138
    %v954 = vmul.f32 %v952, %v930
    %v955 = vmul.f32 %v953, %v945
    %v956 = vadd.f32 %v954, -0.28449672
    %v957 = vadd.f32 %v955, -0.28449672
    %v958 = vmul.f32 %v956, %v930
    %v959 = vmul.f32 %v957, %v945
    %v960 = vadd.f32 %v958, 0.2548296
    %v961 = vadd.f32 %v959, 0.2548296
    %v962 = vmul.f32 %v960, %v930
    %v963 = vmul.f32 %v961, %v945
    %v964 = vsub.f32 0.0, %v910
    %v965 = vsub.f32 0.0, %v911
    %v966 = vmul.f32 %v964, %v910
    %v967 = vmul.f32 %v965, %v911
    %v968 = vmul.f32 %v966, 1.442695
    %v969 = vpow.pop %v968
    %v970 = vmul.f32 %v967, 1.442695
    %v971 = vpow.pop %v970
    %v972 = vmul.f32 %v962, %v969
    %v973 = vmul.f32 %v963, %v971
    %v974 = vsub.f32 1.0, %v972
    %v975 = vsub.f32 1.0, %v973
    %vm976 = vcmp.lt.f32.partialorder %v908, 0.0
    %vm977 = vcmp.lt.f32.partialorder %v909, 0.0
    %v978 = vsub.f32 0.0, %v974
    %v979 = vsub.f32 0.0, %v975
    %v980 = vsel %vm976, %v978, %v974
    %v981 = vsel %vm977, %v979, %v975
    %v982 = vadd.f32 %v980, 1.0
    %v983 = vadd.f32 %v981, 1.0
    %v984 = vmul.f32 %v906, %v982
    %v985 = vmul.f32 %v907, %v983
    %v986 = vld [vmem:[%s11] sm:$0xff]
    %v987 = vld [vmem:[%s11 + $0x8] sm:$0xff]
    %v988 = vld [vmem:[%s11 + $0x10] sm:$0xff]
    %v989 = vld [vmem:[%s11 + $0x18] sm:$0xff]
    %v990 = vld [vmem:[%s11 + $0x20] sm:$0xff]
    %v991 = vld [vmem:[%s11 + $0x28] sm:$0xff]
    %v992 = vld [vmem:[%s11 + $0x30] sm:$0xff]
    %v993 = vld [vmem:[%s11 + $0x38] sm:$0xff]
    %v994 = vpack.c.bf16 %v985, %v984
    %v995 = vpack.c.bf16 %v987, %v986
    %v996 = vpack.c.bf16 %v989, %v988
    %v997 = vpack.c.bf16 %v991, %v990
    %v998 = vpack.c.bf16 %v993, %v992
    %v999 = vld [vmem:[#allocation8] sm:$0x1]
    %v1001 = vperm.slane %v999, 0
    %vm1003 = vcmask 523264
    %v1005 = vsel %vm1003, %v994, 0
    %1007 = vmatpush.bf16.msra.mxu0 0
    %1008 = vmatpush.bf16.msra.mxu0 0
    %1009 = vmatpush.bf16.msra.mxu0 0
    %1010 = vmatpush.bf16.msra.mxu0 0
    %1011 = vmatpush.bf16.msra.mxu0 %v998
    %1012 = vmatpush.bf16.msra.mxu0 %v997
    %1013 = vmatpush.bf16.msra.mxu0 %v996
    %1014 = vmatpush.bf16.msra.mxu0 %v995
    %1015 = vmatmul.bf16.gmra.mxu0 %v1005
    %v1016 = vpop.f32.mrf.mxu0
    %v1017 = vadd.f32 %v1001, %v1016
    %v1018 = vpop.f32.mrf.mxu0
    %v1019 = vadd.f32 %v1001, %v1018
    %1020 = vdwg.mxu0
    %v1021 = vadd.f32 %v820, %v1017
    %v1022 = vadd.f32 %v821, %v1019
    %v1023 = vld [vmem:[#allocation10] sm:$0xff]
    %v1024 = vld [vmem:[#allocation10 + $0x8] sm:$0xff]
    %v1025 = vld [vmem:[#allocation10 + $0x10] sm:$0xff]
    %v1026 = vld [vmem:[#allocation10 + $0x18] sm:$0xff]
    %v1027 = vpack.c.bf16 %v1022, %v1021
    %v1028 = vpack.c.bf16 %v1024, %v1023
    %v1029 = vpack.c.bf16 %v1026, %v1025
    %v1030 = vld [vmem:[#allocation11] sm:$0x1]
    %v1032 = vperm.slane %v1030, 0
    %v1035 = vsel %vm142, %v1027, 0
    %1037 = vmatpush.bf16.msra.mxu0 0
    %1038 = vmatpush.bf16.msra.mxu0 0
    %1039 = vmatpush.bf16.msra.mxu0 0
    %1040 = vmatpush.bf16.msra.mxu0 0
    %1041 = vmatpush.bf16.msra.mxu0 0
    %1042 = vmatpush.bf16.msra.mxu0 0
    %1043 = vmatpush.bf16.msra.mxu0 %v1029
    %1044 = vmatpush.bf16.msra.mxu0 %v1028
    %1045 = vmatmul.bf16.gmra.mxu0 %v1035
    %v1046 = vpop.f32.mrf.mxu0
    %v1047 = vadd.f32 %v1032, %v1046
    %v1048 = vpop.f32.mrf.mxu0
    %v1049 = vadd.f32 %v1032, %v1048
    %1050 = vdwg.mxu0
    %1051 = vst [vmem:[#allocation13] sm:$0xff] %v1047
    %1052 = vst [vmem:[#allocation13 + $0x8] sm:$0xff] %v1049
    // Predicated region
    $region86: #{transformer_encoder_layer.1} parent=1 // pred_check
      _
    $region87: #{transformer_encoder_layer.1} parent=1 // pred_check_branch
      %1054 = sbr.rel (0) target = $region89
    $region88: #{transformer_encoder_layer.1} parent=1 // pred_region
      %1056 = vsyncadd [#allocation4], 0
      %s1057 = sshll.u32 [#allocation13], 4
      %s1058 = int_to_ptr.vmem [resolvable:$true] %s1057
      %s1059 = sshll.u32 %s15, 4
      %s1060 = int_to_ptr.hbm [resolvable:$true] %s1059
      %1065 = dma.vmem_to_hbm [thread:$0]  %s1058, 256, %s1060, [#allocation4], 128, 128, 8
    $region89: #{transformer_encoder_layer.1} parent=1 // pred_fallthru
      _
    // Predicated region
    $region90: #{transformer_encoder_layer.1} parent=1 // pred_check
      _
    $region91: #{transformer_encoder_layer.1} parent=1 // pred_check_branch
      %1067 = sbr.rel (0) target = $region93
    $region92: #{transformer_encoder_layer.1} parent=1 // pred_region
      %1069 = dma.done [#allocation4], 256
    $region93: #{transformer_encoder_layer.1} parent=1 // pred_fallthru
      _
    %1070 = vsyncpa [#allocation3], 1
    %1071 = vsyncpa [#allocation6], 1
    %1072 = vsyncpa [#allocation9], 1
    %1073 = vsyncpa [#allocation12], 1
    %1074 = vsyncpa [#allocation4], 1

</llo_original>
